<compile_context>
chip_gen: v5e
topology: v5e:2x2
jax: 0.10.0
libtpu: 0.0.40
codegen_flags: <defaults>
</compile_context>

<pallas_src>
import math
import functools

import jax
import jax.numpy as jnp
from jax import lax
from jax.experimental import pallas as pl
from jax.experimental.pallas import tpu as pltpu

Q_DIM = 128          # hidden size of the attention query projection (fixed by the module)
NEG_BIG = -1e30      # "minus infinity" that stays finite in f32 arithmetic


def _round_up(x, m):
    return ((x + m - 1) // m) * m


def _cdiv(a, b):
    return -(-a // b)


def _bclassifier_kernel(
    # inputs
    fs_ref,      # [T, D]        feats_slide tile            (compute dtype)
    fb_ref,      # [M, D]        feats_buffer                 (compute dtype)
    wlin_ref,    # [D, D]                                      (compute dtype)
    blin_ref,    # [1, D]                                      f32
    wqv_ref,     # [D, Q_DIM+D]  fused [W_q | W_v]              (compute dtype)
    bq_ref,      # [1, Q_DIM]                                   f32
    # outputs
    a_ref,       # [T, a_cols]   f32  raw scaled (masked) scores (per-tile block)
    m_ref,       # [1, a_cols]   f32  running max        (resident per split)
    l_ref,       # [1, a_cols]   f32  running sum of exp (resident per split)
    bt_ref,      # [D, a_cols]   f32  unnormalized B^T   (resident per split)
    # scratch
    qmax_scr,    # [qm_rows, Q_DIM]  compute dtype
    *,
    use_buffer: bool,
    aggregationtype,
    n_valid: int,
    n_padded: int,
    tile_n: int,
    tiles_per_split: int,
    scale: float,
):
    s_idx = pl.program_id(0)        # split index (parallel axis -> v7x megacore)
    i = pl.program_id(1)            # tile index within the split
    cdt = fs_ref.dtype
    f32 = jnp.float32

    # ---- once per split: buffer query projection + accumulator init -----------
    @pl.when(i == 0)
    def _init():
        qm = jnp.tanh(
            jnp.dot(fb_ref[...], wqv_ref[:, :Q_DIM], preferred_element_type=f32)
            + bq_ref[...])                                          # [M, 128] f32
        if use_buffer and aggregationtype == "mean":
            # mean of dots == dot with the mean -> [1, 128] fast path
            qm = jnp.mean(qm, axis=0, keepdims=True)
        qmax_scr[...] = qm.astype(qmax_scr.dtype)
        m_ref[...] = jnp.full_like(m_ref, NEG_BIG)
        l_ref[...] = jnp.zeros_like(l_ref)
        bt_ref[...] = jnp.zeros_like(bt_ref)

    # ---- streamed per-tile compute (single pass) -------------------------------
    h = jnp.maximum(
        jnp.dot(fs_ref[...], wlin_ref[...], preferred_element_type=f32)
        + blin_ref[...], 0.0).astype(cdt)                           # [T, D] bf16, cast once
    hv = jnp.dot(h, wqv_ref[...], preferred_element_type=f32)       # [T, 128+D] fused matmul
    q = jnp.tanh((hv[:, :Q_DIM] + bq_ref[...]).astype(cdt))         # bf16 tanh (EUP relief)
    v = hv[:, Q_DIM:]                                               # [T, D] f32, b_v deferred

    s = lax.dot_general(
        q, qmax_scr[...],
        dimension_numbers=(((1,), (1,)), ((), ())),
        preferred_element_type=f32)                                 # [T, qm_rows]
    if use_buffer and aggregationtype == "max":
        s = jnp.max(s, axis=1, keepdims=True)
    s = s * scale                                                   # [T, a_cols]

    need_mask = (n_valid != n_padded)
    if need_mask:
        rows = ((s_idx * tiles_per_split + i) * tile_n
                + lax.broadcasted_iota(jnp.int32, (tile_n, 1), 0))
        valid = rows < n_valid
        s = jnp.where(valid, s, NEG_BIG)

    a_ref[...] = s                    # raw scores; normalized in the wrapper

    # ---- flash-style online accumulation of (m, l, B_unnorm) -------------------
    m_old = m_ref[...]
    m_new = jnp.maximum(m_old, jnp.max(s, axis=0, keepdims=True))   # [1, a_cols]
    corr = jnp.exp(m_old - m_new)                                   # [1, a_cols]
    p = jnp.exp(s - m_new)                                          # [T, a_cols]
    if need_mask:
        p = jnp.where(valid, p, 0.0)   # robust even for fully-padded tiles
    l_ref[...] = l_ref[...] * corr + jnp.sum(p, axis=0, keepdims=True)
    m_ref[...] = m_new
    # B^T += V^T @ P (unnormalized); corr broadcasts along lanes -> no transposes.
    bt_ref[...] = bt_ref[...] * corr + lax.dot_general(
        v.astype(cdt), p.astype(cdt),
        dimension_numbers=(((0,), (0,)), ((), ())),
        preferred_element_type=f32)                                 # [D, a_cols]


def bclassifier_buffer_forward(
    feats_slide,
    feats_buffer,
    params,
    *,
    use_buffer: bool,
    aggregationtype,
    tile_n=None,
    num_splits=2,
    compute_dtype=jnp.bfloat16,
):
    """BClassifierBuffer forward. Returns (C, A, B) shaped like the torch module."""
    N, D = feats_slide.shape
    M, _ = feats_buffer.shape
    OC = params["b_fcc"].shape[-1]
    f32 = jnp.float32
    cdt = compute_dtype
    cdt_bytes = jnp.dtype(cdt).itemsize

    a_cols = 1 if (use_buffer and aggregationtype in ("mean", "max")) else M
    assert a_cols == OC, "Conv1d in_channels (output_class) must match B's channel dim"
    assert params["w_fcc"].shape == (OC, D, OC)

    if tile_n is None:
        tile_n = min(1024, _round_up(N, 8))       # raised default (step overhead amort.)
    tile_n = max(8, _round_up(int(tile_n), 8))

    n_tiles = _cdiv(N, tile_n)
    num_splits = max(1, min(int(num_splits), n_tiles))
    tiles_per_split = _cdiv(n_tiles, num_splits)
    n_tiles = tiles_per_split * num_splits
    n_pad = n_tiles * tile_n

    fs = feats_slide
    if n_pad != N:
        fs = jnp.pad(fs, ((0, n_pad - N), (0, 0)))

    qm_rows = 1 if (use_buffer and aggregationtype == "mean") else M

    # bf16 matmul operands (halves HBM traffic + VMEM), f32 biases & accumulation.
    fs_c = fs.astype(cdt)
    fb_c = feats_buffer.astype(cdt)
    w_lin = params["w_lin"].astype(cdt)
    b_lin = params["b_lin"].astype(f32)
    # Fused [D, 128+D] projection weight fills the 256-wide MXU on v6e/v7x.
    w_qv = jnp.concatenate([params["w_q"], params["w_v"]], axis=1).astype(cdt)
    b_q = params["b_q"].astype(f32)

    kernel = functools.partial(
        _bclassifier_kernel,
        use_buffer=use_buffer,
        aggregationtype=aggregationtype,
        n_valid=N,
        n_padded=n_pad,
        tile_n=tile_n,
        tiles_per_split=tiles_per_split,
        scale=1.0 / math.sqrt(float(Q_DIM)),
    )

    const2 = lambda s, i: (0, 0)
    stream = lambda s, i: (s * tiles_per_split + i, 0)
    split3 = lambda s, i: (s, 0, 0)

    in_specs = [
        pl.BlockSpec((tile_n, D), stream),        # feats_slide tile (streamed)
        pl.BlockSpec((M, D), const2),             # feats_buffer (resident)
        pl.BlockSpec((D, D), const2),             # w_lin
        pl.BlockSpec((1, D), const2),             # b_lin
        pl.BlockSpec((D, Q_DIM + D), const2),     # fused w_qv
        pl.BlockSpec((1, Q_DIM), const2),         # b_q
    ]
    out_specs = (
        pl.BlockSpec((tile_n, a_cols), stream),           # raw scores (per-tile)
        pl.BlockSpec((None, 1, a_cols), split3),          # m (resident per split)
        pl.BlockSpec((None, 1, a_cols), split3),          # l (resident per split)
        pl.BlockSpec((None, D, a_cols), split3),          # B^T unnorm (resident per split)
    )
    out_shape = (
        jax.ShapeDtypeStruct((n_pad, a_cols), f32),
        jax.ShapeDtypeStruct((num_splits, 1, a_cols), f32),
        jax.ShapeDtypeStruct((num_splits, 1, a_cols), f32),
        jax.ShapeDtypeStruct((num_splits, D, a_cols), f32),
    )
    scratch_shapes = [pltpu.VMEM((qm_rows, Q_DIM), cdt)]   # q_max, computed once per split

    # ---- VMEM budget (generous headroom, capped at v7x physical 64 MiB) --------
    weight_bytes = ((D * D + D * (Q_DIM + D) + M * D) * cdt_bytes + (D + Q_DIM) * 4)
    stream_bytes = 2 * tile_n * D * cdt_bytes + 2 * tile_n * a_cols * 4
    resident_out_bytes = 2 * (2 * a_cols + D * a_cols) * 4
    scratch_bytes = qm_rows * Q_DIM * cdt_bytes
    temp_bytes = tile_n * (2 * D * cdt_bytes + (Q_DIM + D) * 4
                           + Q_DIM * cdt_bytes + 2 * a_cols * 4)
    est = (2 * weight_bytes + stream_bytes + resident_out_bytes
           + scratch_bytes + 2 * temp_bytes)
    vmem_limit = int(min(max(2 * est + (8 << 20), 32 << 20), 64 << 20))

    # ---- cost estimate (advisory, for XLA scheduling) ---------------------------
    flops = int(
        num_splits * 2 * M * D * Q_DIM          # q_max projection (once per split)
        + 2 * n_pad * D * D                     # lin matmul
        + 2 * n_pad * D * (Q_DIM + D)           # fused q|v matmul
        + 2 * n_pad * Q_DIM * qm_rows           # scores
        + 2 * n_pad * a_cols * D)               # B accumulation
    transcendentals = int(
        n_pad * Q_DIM + num_splits * M * Q_DIM + 2 * n_pad * a_cols
        + 2 * n_tiles * a_cols)
    bytes_accessed = int(
        fs_c.size * cdt_bytes + fb_c.size * cdt_bytes + weight_bytes
        + n_pad * a_cols * 4 + num_splits * (2 + D) * a_cols * 4)

    s_raw, m_parts, l_parts, bt_parts = pl.pallas_call(
        kernel,
        out_shape=out_shape,
        grid_spec=pltpu.PrefetchScalarGridSpec(
            num_scalar_prefetch=0,
            grid=(num_splits, tiles_per_split),
            in_specs=in_specs,
            out_specs=out_specs,
            scratch_shapes=scratch_shapes,
        ),
        compiler_params=pltpu.CompilerParams(
            dimension_semantics=("parallel", "arbitrary"),
            vmem_limit_bytes=vmem_limit,
        ),
        cost_estimate=pl.CostEstimate(
            flops=flops,
            transcendentals=transcendentals,
            bytes_accessed=bytes_accessed,
        ),
    )(fs_c, fb_c, w_lin, b_lin, w_qv, b_q)

    # ---- wrapper epilogue: combine split partials, normalize, Conv1d -----------
    m_g = jnp.max(m_parts, axis=0)                           # [1, a_cols]
    w = jnp.exp(m_parts - m_g)                               # [S, 1, a_cols]
    l_g = jnp.sum(l_parts * w, axis=0)                       # [1, a_cols]
    bt = jnp.sum(bt_parts * w, axis=0)                       # [D, a_cols]
    B = (bt / l_g).T + params["b_v"].astype(f32)             # [a_cols, D], deferred b_v
    A = jnp.exp(s_raw[:N] - m_g) / l_g                       # [N, a_cols]
    # Conv1d(OC, OC, kernel_size=D) on B reduces to a tiny einsum (hoisted to XLA).
    C = (jnp.einsum("cd,cdj->j", B, params["w_fcc"].astype(f32))[None, :]
         + params["b_fcc"].astype(f32))
    return C, A, B.reshape(1, a_cols, D)


def init_params(key, input_size, output_class):
    """Deterministic synthetic parameters.

    Linear weights stored pre-transposed [in, out]; the Conv1d(OC, OC, kernel=D)
    weight (torch layout [OC_out, OC_in, D]) is stored as [OC_in, D, OC_out].
    """
    D, OC = input_size, output_class
    ks = jax.random.split(key, 8)
    s = 0.05
    return {
        "w_lin": s * jax.random.normal(ks[0], (D, D), jnp.float32),
        "b_lin": s * jax.random.normal(ks[1], (1, D), jnp.float32),
        "w_q":   s * jax.random.normal(ks[2], (D, Q_DIM), jnp.float32),
        "b_q":   s * jax.random.normal(ks[3], (1, Q_DIM), jnp.float32),
        "w_v":   s * jax.random.normal(ks[4], (D, D), jnp.float32),
        "b_v":   s * jax.random.normal(ks[5], (1, D), jnp.float32),
        "w_fcc": s * jax.random.normal(ks[6], (OC, D, OC), jnp.float32),
        "b_fcc": s * jax.random.normal(ks[7], (1, OC), jnp.float32),
    }


def _reference_forward(feats_slide, feats_buffer, params, *, use_buffer, aggregationtype):
    """Pure-JAX f32 reference mirroring the torch module."""
    fs = feats_slide.astype(jnp.float32)
    fb = feats_buffer.astype(jnp.float32)
    h = jnp.maximum(fs @ params["w_lin"] + params["b_lin"], 0.0)
    V = h @ params["w_v"] + params["b_v"]
    Q = jnp.tanh(h @ params["w_q"] + params["b_q"])
    q_max = jnp.tanh(fb @ params["w_q"] + params["b_q"])
    A = Q @ q_max.T
    if use_buffer:
        if aggregationtype == "mean":
            A = jnp.mean(A, axis=1, keepdims=True)
        elif aggregationtype == "max":
            A = jnp.max(A, axis=1, keepdims=True)
    A = jax.nn.softmax(A / jnp.sqrt(jnp.float32(Q_DIM)), axis=0)
    B = A.T @ V
    C = jnp.einsum("cd,cdj->j", B, params["w_fcc"])[None, :] + params["b_fcc"]
    return C, A, B.reshape(1, B.shape[0], B.shape[1])


if __name__ == "__main__":
    key = jax.random.PRNGKey(0)
    k_fs, k_fb, k_p_full, k_p_agg = jax.random.split(key, 4)

    # Small but realistic-layout shapes: D lane-dense (128), N not a tile
    # multiple (masked last tile), multiple tiles per split (2-way split path).
    N, M, D = 60, 8, 128
    TILE_N = 16

    feats_slide = jax.random.normal(k_fs, (N, D), jnp.float32)
    feats_buffer = jax.random.normal(k_fb, (M, D), jnp.float32)

    configs = [
        ("no-buffer", False, None, M),         # A: [N, M], OC = M
        ("buffer-mean", True, "mean", 1),      # A: [N, 1], OC = 1
        ("buffer-max", True, "max", 1),        # A: [N, 1], OC = 1
    ]
    params_by_oc = {}
    for name, use_buffer, agg, oc in configs:
        if oc not in params_by_oc:
            params_by_oc[oc] = init_params(k_p_full if oc == M else k_p_agg, D, oc)
        params = params_by_oc[oc]
        a_cols = 1 if (use_buffer and agg in ("mean", "max")) else M

        C_ref, A_ref, B_ref = _reference_forward(
            feats_slide, feats_buffer, params,
            use_buffer=use_buffer, aggregationtype=agg,
        )

        # Exercise both the explicit multi-tile / 2-split path and the default
        # single-tile / single-split path.
        for tile_n in (TILE_N, None):
            C, A, B = bclassifier_buffer_forward(
                feats_slide, feats_buffer, params,
                use_buffer=use_buffer, aggregationtype=agg, tile_n=tile_n,
                compute_dtype=jnp.bfloat16,
            )
            jax.block_until_ready((C, A, B))

            assert C.shape == (1, oc), name
            assert A.shape == (N, a_cols), name
            assert B.shape == (1, oc, D), name
            # bf16 MXU operands + bf16 tanh vs f32 reference -> relaxed tol.
            assert jnp.allclose(A, A_ref, atol=3e-2, rtol=3e-2), name
            assert jnp.allclose(B, B_ref, atol=3e-2, rtol=3e-2), name
            assert jnp.allclose(C, C_ref, atol=3e-2, rtol=3e-2), name

    print("KERNEL_OK")
</pallas_src>

<mosaic_0001>
module attributes {stable_mosaic.version = 11 : i64} {
  func.func @_bclassifier_kernel(%arg0: i32, %arg1: i32, %arg2: memref<16x128xbf16, #tpu.memory_space<vmem>>, %arg3: memref<8x128xbf16, #tpu.memory_space<vmem>>, %arg4: memref<128x128xbf16, #tpu.memory_space<vmem>>, %arg5: memref<1x128xf32, #tpu.memory_space<vmem>>, %arg6: memref<128x256xbf16, #tpu.memory_space<vmem>>, %arg7: memref<1x128xf32, #tpu.memory_space<vmem>>, %arg8: memref<16x8xf32, #tpu.memory_space<vmem>>, %arg9: memref<1x1x8xf32, #tpu.memory_space<vmem>>, %arg10: memref<1x1x8xf32, #tpu.memory_space<vmem>>, %arg11: memref<1x128x8xf32, #tpu.memory_space<vmem>>, %arg12: memref<8x128xbf16, #tpu.memory_space<vmem>>) attributes {dimension_semantics = [#tpu.dimension_semantics<parallel>, #tpu.dimension_semantics<arbitrary>], iteration_bounds = array<i64: 2, 2>, scalar_prefetch = 0 : i64, scratch_operands = 1 : i64, tpu.core_type = #tpu.core_type<tc>, window_params = [{transform_indices = @transform_0, window_bounds = array<i64: 16, 128>}, {pipeline_mode = #tpu.pipeline_mode<synchronous>, transform_indices = @transform_1, window_bounds = array<i64: 8, 128>}, {pipeline_mode = #tpu.pipeline_mode<synchronous>, transform_indices = @transform_2, window_bounds = array<i64: 128, 128>}, {pipeline_mode = #tpu.pipeline_mode<synchronous>, transform_indices = @transform_3, window_bounds = array<i64: 1, 128>}, {pipeline_mode = #tpu.pipeline_mode<synchronous>, transform_indices = @transform_4, window_bounds = array<i64: 128, 256>}, {pipeline_mode = #tpu.pipeline_mode<synchronous>, transform_indices = @transform_5, window_bounds = array<i64: 1, 128>}, {transform_indices = @transform_6, window_bounds = array<i64: 16, 8>}, {transform_indices = @transform_7, window_bounds = array<i64: 1, 1, 8>}, {transform_indices = @transform_8, window_bounds = array<i64: 1, 1, 8>}, {transform_indices = @transform_9, window_bounds = array<i64: 1, 128, 8>}]} {
    %c0_i32 = arith.constant 0 : i32
    %0 = arith.cmpi eq, %arg1, %c0_i32 : i32
    %1 = arith.extui %0 : i1 to i32
    %c0_i32_0 = arith.constant 0 : i32
    %2 = arith.cmpi ne, %1, %c0_i32_0 : i32
    scf.if %2 {
      %c0_41 = arith.constant 0 : index
      %c0_42 = arith.constant 0 : index
      %75 = vector.load %arg3[%c0_41, %c0_42] : memref<8x128xbf16, #tpu.memory_space<vmem>>, vector<8x128xbf16>
      %c0_43 = arith.constant 0 : index
      %c0_44 = arith.constant 0 : index
      %76 = vector.load %arg6[%c0_43, %c0_44] : memref<128x256xbf16, #tpu.memory_space<vmem>>, vector<128x128xbf16>
      %cst_45 = arith.constant dense<0.000000e+00> : vector<8x128xf32>
      %77 = tpu.matmul %75, %76, %cst_45 {dimension_numbers = #tpu.dot_dimension_numbers<[1], [0], [0], [1], [0, 0, 1, 1], [], []>} : vector<8x128xbf16>, vector<128x128xbf16>, vector<8x128xf32> -> vector<8x128xf32>
      %c0_46 = arith.constant 0 : index
      %c0_47 = arith.constant 0 : index
      %78 = vector.load %arg7[%c0_46, %c0_47] : memref<1x128xf32, #tpu.memory_space<vmem>>, vector<1x128xf32>
      %79 = vector.broadcast %78 : vector<1x128xf32> to vector<8x128xf32>
      %80 = arith.addf %77, %79 : vector<8x128xf32>
      %81 = math.tanh %80 : vector<8x128xf32>
      %82 = arith.truncf %81 : vector<8x128xf32> to vector<8x128xbf16>
      %c0_48 = arith.constant 0 : index
      %c0_49 = arith.constant 0 : index
      %83 = vector.load %arg12[%c0_48, %c0_49] : memref<8x128xbf16, #tpu.memory_space<vmem>>, vector<8x128xbf16>
      tpu.vector_store %arg12[%c0_48, %c0_49], %82 {strides = array<i32>} : memref<8x128xbf16, #tpu.memory_space<vmem>>, vector<8x128xbf16>,
      %cst_50 = arith.constant -1.000000e+30 : f32
      %84 = vector.broadcast %cst_50 : f32 to vector<1x8xf32>
      %c0_51 = arith.constant 0 : index
      %c0_52 = arith.constant 0 : index
      %c0_53 = arith.constant 0 : index
      %85 = vector.load %arg9[%c0_51, %c0_52, %c0_53] : memref<1x1x8xf32, #tpu.memory_space<vmem>>, vector<1x1x8xf32>
      %86 = vector.shape_cast %85 : vector<1x1x8xf32> to vector<1x8xf32>
      %87 = vector.shape_cast %84 : vector<1x8xf32> to vector<1x1x8xf32>
      tpu.vector_store %arg9[%c0_51, %c0_52, %c0_53], %87 {strides = array<i32>} : memref<1x1x8xf32, #tpu.memory_space<vmem>>, vector<1x1x8xf32>,
      %cst_54 = arith.constant 0.000000e+00 : f32
      %88 = vector.broadcast %cst_54 : f32 to vector<1x8xf32>
      %c0_55 = arith.constant 0 : index
      %c0_56 = arith.constant 0 : index
      %c0_57 = arith.constant 0 : index
      %89 = vector.load %arg10[%c0_55, %c0_56, %c0_57] : memref<1x1x8xf32, #tpu.memory_space<vmem>>, vector<1x1x8xf32>
      %90 = vector.shape_cast %89 : vector<1x1x8xf32> to vector<1x8xf32>
      %91 = vector.shape_cast %88 : vector<1x8xf32> to vector<1x1x8xf32>
      tpu.vector_store %arg10[%c0_55, %c0_56, %c0_57], %91 {strides = array<i32>} : memref<1x1x8xf32, #tpu.memory_space<vmem>>, vector<1x1x8xf32>,
      %cst_58 = arith.constant 0.000000e+00 : f32
      %92 = vector.broadcast %cst_58 : f32 to vector<128x8xf32>
      %c0_59 = arith.constant 0 : index
      %c0_60 = arith.constant 0 : index
      %c0_61 = arith.constant 0 : index
      %93 = vector.load %arg11[%c0_59, %c0_60, %c0_61] : memref<1x128x8xf32, #tpu.memory_space<vmem>>, vector<1x128x8xf32>
      %94 = vector.shape_cast %93 : vector<1x128x8xf32> to vector<128x8xf32>
      %95 = vector.shape_cast %92 : vector<128x8xf32> to vector<1x128x8xf32>
      tpu.vector_store %arg11[%c0_59, %c0_60, %c0_61], %95 {strides = array<i32>} : memref<1x128x8xf32, #tpu.memory_space<vmem>>, vector<1x128x8xf32>,
    } else {
    }
    %c0 = arith.constant 0 : index
    %c0_1 = arith.constant 0 : index
    %3 = vector.load %arg2[%c0, %c0_1] : memref<16x128xbf16, #tpu.memory_space<vmem>>, vector<16x128xbf16>
    %c0_2 = arith.constant 0 : index
    %c0_3 = arith.constant 0 : index
    %4 = vector.load %arg4[%c0_2, %c0_3] : memref<128x128xbf16, #tpu.memory_space<vmem>>, vector<128x128xbf16>
    %cst = arith.constant dense<0.000000e+00> : vector<16x128xf32>
    %5 = tpu.matmul %3, %4, %cst {dimension_numbers = #tpu.dot_dimension_numbers<[1], [0], [0], [1], [0, 0, 1, 1], [], []>} : vector<16x128xbf16>, vector<128x128xbf16>, vector<16x128xf32> -> vector<16x128xf32>
    %c0_4 = arith.constant 0 : index
    %c0_5 = arith.constant 0 : index
    %6 = vector.load %arg5[%c0_4, %c0_5] : memref<1x128xf32, #tpu.memory_space<vmem>>, vector<1x128xf32>
    %7 = vector.broadcast %6 : vector<1x128xf32> to vector<16x128xf32>
    %8 = arith.addf %5, %7 : vector<16x128xf32>
    %cst_6 = arith.constant 0.000000e+00 : f32
    %9 = vector.broadcast %cst_6 : f32 to vector<16x128xf32>
    %10 = arith.maximumf %8, %9 : vector<16x128xf32>
    %11 = arith.truncf %10 : vector<16x128xf32> to vector<16x128xbf16>
    %c0_7 = arith.constant 0 : index
    %c0_8 = arith.constant 0 : index
    %12 = vector.load %arg6[%c0_7, %c0_8] : memref<128x256xbf16, #tpu.memory_space<vmem>>, vector<128x256xbf16>
    %cst_9 = arith.constant dense<0.000000e+00> : vector<16x256xf32>
    %13 = tpu.matmul %11, %12, %cst_9 {dimension_numbers = #tpu.dot_dimension_numbers<[1], [0], [0], [1], [0, 0, 1, 1], [], []>} : vector<16x128xbf16>, vector<128x256xbf16>, vector<16x256xf32> -> vector<16x256xf32>
    %14 = vector.extract_strided_slice %13 {offsets = [0, 0], sizes = [16, 128], strides = [1, 1]} : vector<16x256xf32> to vector<16x128xf32>
    %c0_10 = arith.constant 0 : index
    %c0_11 = arith.constant 0 : index
    %15 = vector.load %arg7[%c0_10, %c0_11] : memref<1x128xf32, #tpu.memory_space<vmem>>, vector<1x128xf32>
    %16 = vector.broadcast %15 : vector<1x128xf32> to vector<16x128xf32>
    %17 = arith.addf %14, %16 : vector<16x128xf32>
    %18 = arith.truncf %17 : vector<16x128xf32> to vector<16x128xbf16>
    %19 = math.tanh %18 : vector<16x128xbf16>
    %20 = vector.extract_strided_slice %13 {offsets = [0, 128], sizes = [16, 128], strides = [1, 1]} : vector<16x256xf32> to vector<16x128xf32>
    %c0_12 = arith.constant 0 : index
    %c0_13 = arith.constant 0 : index
    %21 = vector.load %arg12[%c0_12, %c0_13] : memref<8x128xbf16, #tpu.memory_space<vmem>>, vector<8x128xbf16>
    %cst_14 = arith.constant dense<0.000000e+00> : vector<16x8xf32>
    %22 = tpu.matmul %19, %21, %cst_14 {dimension_numbers = #tpu.dot_dimension_numbers<[1], [1], [0], [0], [0, 0, 1, 0], [], []>} : vector<16x128xbf16>, vector<8x128xbf16>, vector<16x8xf32> -> vector<16x8xf32>
    %cst_15 = arith.constant 0.0883883461 : f32
    %23 = vector.broadcast %cst_15 : f32 to vector<16x8xf32>
    %24 = arith.mulf %22, %23 : vector<16x8xf32>
    %c2_i32 = arith.constant 2 : i32
    %25 = arith.muli %arg0, %c2_i32 : i32
    %26 = arith.addi %25, %arg1 : i32
    %c16_i32 = arith.constant 16 : i32
    %27 = arith.muli %26, %c16_i32 : i32
    %28 = tpu.iota {dimensions = array<i32: 0>} : vector<16x1xi32>
    %29 = vector.broadcast %27 : i32 to vector<16x1xi32>
    %30 = arith.addi %29, %28 : vector<16x1xi32>
    %c60_i32 = arith.constant 60 : i32
    %31 = vector.broadcast %c60_i32 : i32 to vector<16x1xi32>
    %32 = arith.cmpi slt, %30, %31 : vector<16x1xi32>
    %cst_16 = arith.constant -1.000000e+30 : f32
    %33 = vector.shape_cast %32 : vector<16x1xi1> to vector<16x1xi1>
    %34 = vector.broadcast %33 : vector<16x1xi1> to vector<16x8xi1>
    %35 = vector.broadcast %cst_16 : f32 to vector<16x8xf32>
    %36 = arith.select %34, %24, %35 : vector<16x8xi1>, vector<16x8xf32>
    %c0_17 = arith.constant 0 : index
    %c0_18 = arith.constant 0 : index
    %37 = vector.load %arg8[%c0_17, %c0_18] : memref<16x8xf32, #tpu.memory_space<vmem>>, vector<16x8xf32>
    tpu.vector_store %arg8[%c0_17, %c0_18], %36 {strides = array<i32>} : memref<16x8xf32, #tpu.memory_space<vmem>>, vector<16x8xf32>,
    %c0_19 = arith.constant 0 : index
    %c0_20 = arith.constant 0 : index
    %c0_21 = arith.constant 0 : index
    %38 = vector.load %arg9[%c0_19, %c0_20, %c0_21] : memref<1x1x8xf32, #tpu.memory_space<vmem>>, vector<1x1x8xf32>
    %39 = vector.shape_cast %38 : vector<1x1x8xf32> to vector<1x8xf32>
    %cst_22 = arith.constant dense<0xFF800000> : vector<8xf32>
    %40 = vector.multi_reduction <maximumf>, %36, %cst_22 [0] : vector<16x8xf32> to vector<8xf32>
    %41 = vector.shape_cast %40 : vector<8xf32> to vector<1x8xf32>
    %42 = arith.maximumf %39, %41 : vector<1x8xf32>
    %43 = arith.subf %39, %42 : vector<1x8xf32>
    %44 = math.exp %43 : vector<1x8xf32>
    %45 = vector.broadcast %42 : vector<1x8xf32> to vector<16x8xf32>
    %46 = arith.subf %36, %45 : vector<16x8xf32>
    %47 = math.exp %46 : vector<16x8xf32>
    %cst_23 = arith.constant 0.000000e+00 : f32
    %48 = vector.shape_cast %32 : vector<16x1xi1> to vector<16x1xi1>
    %49 = vector.broadcast %48 : vector<16x1xi1> to vector<16x8xi1>
    %50 = vector.broadcast %cst_23 : f32 to vector<16x8xf32>
    %51 = arith.select %49, %47, %50 : vector<16x8xi1>, vector<16x8xf32>
    %c0_24 = arith.constant 0 : index
    %c0_25 = arith.constant 0 : index
    %c0_26 = arith.constant 0 : index
    %52 = vector.load %arg10[%c0_24, %c0_25, %c0_26] : memref<1x1x8xf32, #tpu.memory_space<vmem>>, vector<1x1x8xf32>
    %53 = vector.shape_cast %52 : vector<1x1x8xf32> to vector<1x8xf32>
    %54 = arith.mulf %53, %44 : vector<1x8xf32>
    %cst_27 = arith.constant dense<0.000000e+00> : vector<8xf32>
    %55 = vector.multi_reduction <add>, %51, %cst_27 [0] : vector<16x8xf32> to vector<8xf32>
    %56 = vector.shape_cast %55 : vector<8xf32> to vector<1x8xf32>
    %57 = arith.addf %54, %56 : vector<1x8xf32>
    %c0_28 = arith.constant 0 : index
    %c0_29 = arith.constant 0 : index
    %c0_30 = arith.constant 0 : index
    %58 = vector.load %arg10[%c0_28, %c0_29, %c0_30] : memref<1x1x8xf32, #tpu.memory_space<vmem>>, vector<1x1x8xf32>
    %59 = vector.shape_cast %58 : vector<1x1x8xf32> to vector<1x8xf32>
    %60 = vector.shape_cast %57 : vector<1x8xf32> to vector<1x1x8xf32>
    tpu.vector_store %arg10[%c0_28, %c0_29, %c0_30], %60 {strides = array<i32>} : memref<1x1x8xf32, #tpu.memory_space<vmem>>, vector<1x1x8xf32>,
    %c0_31 = arith.constant 0 : index
    %c0_32 = arith.constant 0 : index
    %c0_33 = arith.constant 0 : index
    %61 = vector.load %arg9[%c0_31, %c0_32, %c0_33] : memref<1x1x8xf32, #tpu.memory_space<vmem>>, vector<1x1x8xf32>
    %62 = vector.shape_cast %61 : vector<1x1x8xf32> to vector<1x8xf32>
    %63 = vector.shape_cast %42 : vector<1x8xf32> to vector<1x1x8xf32>
    tpu.vector_store %arg9[%c0_31, %c0_32, %c0_33], %63 {strides = array<i32>} : memref<1x1x8xf32, #tpu.memory_space<vmem>>, vector<1x1x8xf32>,
    %c0_34 = arith.constant 0 : index
    %c0_35 = arith.constant 0 : index
    %c0_36 = arith.constant 0 : index
    %64 = vector.load %arg11[%c0_34, %c0_35, %c0_36] : memref<1x128x8xf32, #tpu.memory_space<vmem>>, vector<1x128x8xf32>
    %65 = vector.shape_cast %64 : vector<1x128x8xf32> to vector<128x8xf32>
    %66 = vector.broadcast %44 : vector<1x8xf32> to vector<128x8xf32>
    %67 = arith.mulf %65, %66 : vector<128x8xf32>
    %68 = arith.truncf %20 : vector<16x128xf32> to vector<16x128xbf16>
    %69 = arith.truncf %51 : vector<16x8xf32> to vector<16x8xbf16>
    %cst_37 = arith.constant dense<0.000000e+00> : vector<128x8xf32>
    %70 = tpu.matmul %68, %69, %cst_37 {dimension_numbers = #tpu.dot_dimension_numbers<[0], [0], [1], [1], [0, 1, 1, 1], [], []>} : vector<16x128xbf16>, vector<16x8xbf16>, vector<128x8xf32> -> vector<128x8xf32>
    %71 = arith.addf %67, %70 : vector<128x8xf32>
    %c0_38 = arith.constant 0 : index
    %c0_39 = arith.constant 0 : index
    %c0_40 = arith.constant 0 : index
    %72 = vector.load %arg11[%c0_38, %c0_39, %c0_40] : memref<1x128x8xf32, #tpu.memory_space<vmem>>, vector<1x128x8xf32>
    %73 = vector.shape_cast %72 : vector<1x128x8xf32> to vector<128x8xf32>
    %74 = vector.shape_cast %71 : vector<128x8xf32> to vector<1x128x8xf32>
    tpu.vector_store %arg11[%c0_38, %c0_39, %c0_40], %74 {strides = array<i32>} : memref<1x128x8xf32, #tpu.memory_space<vmem>>, vector<1x128x8xf32>,
    return
  }
  func.func @transform_0(%arg0: i32, %arg1: i32) -> (i32, i32) {
    %c2_i32 = arith.constant 2 : i32
    %0 = arith.muli %arg0, %c2_i32 : i32
    %1 = arith.addi %0, %arg1 : i32
    %c0_i32 = arith.constant 0 : i32
    %c0_i32_0 = arith.constant 0 : i32
    return %1, %c0_i32 : i32, i32
  }
  func.func @transform_1(%arg0: i32, %arg1: i32) -> (i32, i32) {
    %c0_i32 = arith.constant 0 : i32
    %c0_i32_0 = arith.constant 0 : i32
    %c0_i32_1 = arith.constant 0 : i32
    return %c0_i32, %c0_i32_0 : i32, i32
  }
  func.func @transform_2(%arg0: i32, %arg1: i32) -> (i32, i32) {
    %c0_i32 = arith.constant 0 : i32
    %c0_i32_0 = arith.constant 0 : i32
    %c0_i32_1 = arith.constant 0 : i32
    return %c0_i32, %c0_i32_0 : i32, i32
  }
  func.func @transform_3(%arg0: i32, %arg1: i32) -> (i32, i32) {
    %c0_i32 = arith.constant 0 : i32
    %c0_i32_0 = arith.constant 0 : i32
    %c0_i32_1 = arith.constant 0 : i32
    return %c0_i32, %c0_i32_0 : i32, i32
  }
  func.func @transform_4(%arg0: i32, %arg1: i32) -> (i32, i32) {
    %c0_i32 = arith.constant 0 : i32
    %c0_i32_0 = arith.constant 0 : i32
    %c0_i32_1 = arith.constant 0 : i32
    return %c0_i32, %c0_i32_0 : i32, i32
  }
  func.func @transform_5(%arg0: i32, %arg1: i32) -> (i32, i32) {
    %c0_i32 = arith.constant 0 : i32
    %c0_i32_0 = arith.constant 0 : i32
    %c0_i32_1 = arith.constant 0 : i32
    return %c0_i32, %c0_i32_0 : i32, i32
  }
  func.func @transform_6(%arg0: i32, %arg1: i32) -> (i32, i32) {
    %c2_i32 = arith.constant 2 : i32
    %0 = arith.muli %arg0, %c2_i32 : i32
    %1 = arith.addi %0, %arg1 : i32
    %c0_i32 = arith.constant 0 : i32
    %c0_i32_0 = arith.constant 0 : i32
    return %1, %c0_i32 : i32, i32
  }
  func.func @transform_7(%arg0: i32, %arg1: i32) -> (i32, i32, i32) {
    %c0_i32 = arith.constant 0 : i32
    %c0_i32_0 = arith.constant 0 : i32
    %c0_i32_1 = arith.constant 0 : i32
    return %arg0, %c0_i32, %c0_i32_0 : i32, i32, i32
  }
  func.func @transform_8(%arg0: i32, %arg1: i32) -> (i32, i32, i32) {
    %c0_i32 = arith.constant 0 : i32
    %c0_i32_0 = arith.constant 0 : i32
    %c0_i32_1 = arith.constant 0 : i32
    return %arg0, %c0_i32, %c0_i32_0 : i32, i32, i32
  }
  func.func @transform_9(%arg0: i32, %arg1: i32) -> (i32, i32, i32) {
    %c0_i32 = arith.constant 0 : i32
    %c0_i32_0 = arith.constant 0 : i32
    %c0_i32_1 = arith.constant 0 : i32
    return %arg0, %c0_i32, %c0_i32_0 : i32, i32, i32
  }
}

</mosaic_0001>

<llo_original>
// kernel: tpu_custom_call.1
$region0: #{tpu_custom_call.1}
  #allocation0 [shape = 'u32[]', space=smem, size = 0x4, offset = 0x4, fixed_abs, tag = 'smem constant byte address 0x4 - core index']
  #allocation1 [shape = 'u32[72,128]{1,0:T(1,128)}', space=vmem, size = 0x9000, scoped, tag = 'internal scratch']
  #allocation2 [shape = 'bf16[8,128]{1,0:T(8,128)(2,1)}', space=vmem, size = 0x800, scoped, tag = 'scratch operand']
  %s0 = inlined_call_operand.hbm [shape: bf16[64,128], index: 0, kind: input, shape index: {}]
  %s1 = inlined_call_operand.hbm [shape: bf16[8,128], index: 1, kind: input, shape index: {}]
  %s2 = inlined_call_operand.hbm [shape: bf16[128,128], index: 2, kind: input, shape index: {}]
  %s3 = inlined_call_operand.vmem [shape: f32[1,128], index: 3, kind: input, shape index: {}]
  %s4 = inlined_call_operand.hbm [shape: bf16[128,256], index: 4, kind: input, shape index: {}]
  %s5 = inlined_call_operand.vmem [shape: f32[1,128], index: 5, kind: input, shape index: {}]
  %s6 = inlined_call_operand.vmem [shape: f32[64,8], index: 6, kind: output, shape index: {0}]
  %s7 = inlined_call_operand.hbm [shape: f32[2,1,8], index: 7, kind: output, shape index: {1}]
  %s8 = inlined_call_operand.hbm [shape: f32[2,1,8], index: 8, kind: output, shape index: {2}]
  %s9 = inlined_call_operand.vmem [shape: f32[2,128,8], index: 9, kind: output, shape index: {3}]
  %10 = xla_tuple %s6, %s7, %s8, %s9
  %s11 = sld [smem:[#allocation0]]
  $region101: #{tpu_custom_call.1} parent=0
    _
  %s13 = ssub.s32 1, %s11
  %s14 = scalar_select 0, %s13, %s11
  $region1: #{tpu_custom_call.1} parent=0
    #allocation3 [shape = 'u8[8192]{0}', space=vmem, size = 0x2000, scoped, tag = 'input window, operand 0']
    #allocation4 [shape = 's32[2]{0}', space=sflag, size = 0x8, scoped, tag = 'scoped memory for tpu_custom_call.1']
    #allocation5 [shape = 's32[2]{0}', space=sflag, size = 0x8, scoped, tag = 'scoped memory for tpu_custom_call.1']
    #allocation6 [shape = 'u8[2048]{0}', space=vmem, size = 0x800, scoped, tag = 'input window, operand 1, single buffered']
    #allocation7 [shape = 's32[1]{0}', space=sflag, size = 0x4, scoped, tag = 'scoped memory for tpu_custom_call.1']
    #allocation8 [shape = 'u8[32768]{0}', space=vmem, size = 0x8000, scoped, tag = 'input window, operand 2, single buffered']
    #allocation9 [shape = 'u8[65536]{0}', space=vmem, size = 0x10000, scoped, tag = 'input window, operand 4, single buffered']
    #allocation10 [shape = 's32[1]{0}', space=sflag, size = 0x4, scoped, tag = 'scoped memory for tpu_custom_call.1']
    #allocation11 [shape = 'u8[1024]{0}', space=vmem, size = 0x400, scoped, tag = 'output window, operand 1']
    #allocation12 [shape = 'u8[1024]{0}', space=vmem, size = 0x400, scoped, tag = 'output window, operand 2']
    #allocation13 [shape = 's32[2]{0}', space=sflag, size = 0x8, scoped, tag = 'scoped memory for tpu_custom_call.1']
    %15 = vsyncpa [#allocation4], 0
    %s16 = scalar_lea.sflag [#allocation4], 1
    %17 = vsyncpa %s16, 0
    %18 = vsyncpa [#allocation7], 0
    %19 = vsyncpa [#allocation10], 0
    %20 = vsyncpa [#allocation5], 0
    %s21 = scalar_lea.sflag [#allocation5], 1
    %22 = vsyncpa %s21, 0
    %23 = vsyncpa [#allocation13], 0
    %s24 = scalar_lea.sflag [#allocation13], 1
    %25 = vsyncpa %s24, 0
    loop: start=0, step=1, limit=6
    $region2: #{tpu_custom_call.1} parent=1 // loop_pre_header
      _
    $region3: #{tpu_custom_call.1} parent=1 // loop_header
      %s27 = sphi 0, %s31
      %p28 = scmp.ge.s32.totalorder %s27, 6
      %s34 = sphi 0, %s46
      %s35 = sphi 0, %s42
      %s36 = sphi 0, %s34
      %s37 = sphi 0, %s35
      %s38 = sphi 0, %s36
      %s39 = sphi 0, %s37
      %s53 = sphi 0, %s55
      %s56 = sphi 0, %s53
      %s57 = sphi 0, %s56
      %s73 = sphi 0, %s57
      %s77 = sphi 0, %s77
      %s79 = sphi 0, %s77
      %s80 = sphi 0, %s79
      %s94 = sphi 0, %s80
      %s98 = sphi 0, %s98
      %s100 = sphi 0, %s98
      %s101 = sphi 0, %s100
      %s115 = sphi 0, %s101
      %s119 = sphi 0, %s119
      %s121 = sphi 0, %s119
      %s122 = sphi 0, %s121
      %s136 = sphi 0, %s122
      %s140 = sphi 0, %s140
      %s142 = sphi 0, %s140
      %s143 = sphi 0, %s142
      %s157 = sphi 0, %s143
      %s161 = sphi 0, %s161
      %s163 = sphi 0, %s161
      %s164 = sphi 0, %s163
      %s178 = sphi 0, %s164
      %s188 = sphi 0, %s190
      %s191 = sphi 0, %s188
      %s192 = sphi 0, %s191
      %s208 = sphi 0, %s192
      %s214 = sphi 0, %s216
      %s217 = sphi 0, %s214
      %s218 = sphi 0, %s217
      %s234 = sphi 0, %s218
      %s240 = sphi 0, %s242
      %s243 = sphi 0, %s240
      %s244 = sphi 0, %s243
      %s260 = sphi 0, %s244
      %s266 = sphi 0, %s268
      %s269 = sphi 0, %s266
      %s270 = sphi 0, %s269
      %s286 = sphi 0, %s270
    $region4: #{tpu_custom_call.1} parent=1 // loop_header_branch
      %30 = sbr.rel (%p28) target = $region8
    $region5: #{tpu_custom_call.1} parent=1 // loop_body
      %s32 = ssub.s32 %s27, 1
      %s33 = ssub.s32 %s27, 2
      %s40 = sadd.s32 1, %s35
      %p41 = scmp.ge.s32.totalorder %s40, 2
      %s42 = scalar_select %p41, 0, %s40
      %s43 = sadd.s32 1, %s34
      %s44 = scalar_select %p41, %s43, %s34
      %p45 = scmp.ge.s32.totalorder %s44, 2
      %s46 = scalar_select %p45, 0, %s44
      %s47 = smul.u32 %s34, 2
      %s48 = sadd.s32 %s47, %s35
      %s49 = smul.u32 %s46, 2
      %s50 = sadd.s32 %s49, %s42
      %s51 = ssub.s32 %s48, %s50
      %p52 = scmp.eq.s32.totalorder %s51, 0
      %s54 = sadd.s32 %s53, 1
      %s55 = scalar_select %p52, %s53, %s54
      %p58 = pneg %p52
      %p59 = scmp.eq.s32.totalorder %s27, 3
      %p60 = por %p58, %p59
      %p61 = scmp.ne.s32.totalorder %s53, %s56
      %p62 = scmp.eq.s32.totalorder %s27, 0
      %p63 = por %p61, %p62
      %p64 = scmp.ne.s32.totalorder %s53, %s56
      %p65 = scmp.eq.s32.totalorder %s32, 3
      %p66 = por %p64, %p65
      %p67 = scmp.ne.s32.totalorder %s56, %s57
      %p68 = scmp.eq.s32.totalorder %s32, 0
      %p69 = por %p67, %p68
      %p70 = scmp.ne.s32.totalorder %s56, %s57
      %p71 = scmp.eq.s32.totalorder %s33, 3
      %p72 = por %p70, %p71
      %p74 = scmp.ne.s32.totalorder %s57, %s73
      %p75 = scmp.eq.s32.totalorder %s33, 0
      %p76 = por %p74, %p75
      %s78 = sadd.s32 %s77, 1
      %p81 = scmp.eq.s32.totalorder %s27, 3
      %p82 = scmp.ne.s32.totalorder %s77, %s79
      %p83 = scmp.eq.s32.totalorder %s27, 0
      %p84 = por %p82, %p83
      %p85 = scmp.ne.s32.totalorder %s77, %s79
      %p86 = scmp.eq.s32.totalorder %s32, 3
      %p87 = por %p85, %p86
      %p88 = scmp.ne.s32.totalorder %s79, %s80
      %p89 = scmp.eq.s32.totalorder %s32, 0
      %p90 = por %p88, %p89
      %p91 = scmp.ne.s32.totalorder %s79, %s80
      %p92 = scmp.eq.s32.totalorder %s33, 3
      %p93 = por %p91, %p92
      %p95 = scmp.ne.s32.totalorder %s80, %s94
      %p96 = scmp.eq.s32.totalorder %s33, 0
      %p97 = por %p95, %p96
      %s99 = sadd.s32 %s98, 1
      %p102 = scmp.eq.s32.totalorder %s27, 3
      %p103 = scmp.ne.s32.totalorder %s98, %s100
      %p104 = scmp.eq.s32.totalorder %s27, 0
      %p105 = por %p103, %p104
      %p106 = scmp.ne.s32.totalorder %s98, %s100
      %p107 = scmp.eq.s32.totalorder %s32, 3
      %p108 = por %p106, %p107
      %p109 = scmp.ne.s32.totalorder %s100, %s101
      %p110 = scmp.eq.s32.totalorder %s32, 0
      %p111 = por %p109, %p110
      %p112 = scmp.ne.s32.totalorder %s100, %s101
      %p113 = scmp.eq.s32.totalorder %s33, 3
      %p114 = por %p112, %p113
      %p116 = scmp.ne.s32.totalorder %s101, %s115
      %p117 = scmp.eq.s32.totalorder %s33, 0
      %p118 = por %p116, %p117
      %s120 = sadd.s32 %s119, 1
      %p123 = scmp.eq.s32.totalorder %s27, 3
      %p124 = scmp.ne.s32.totalorder %s119, %s121
      %p125 = scmp.eq.s32.totalorder %s27, 0
      %p126 = por %p124, %p125
      %p127 = scmp.ne.s32.totalorder %s119, %s121
      %p128 = scmp.eq.s32.totalorder %s32, 3
      %p129 = por %p127, %p128
      %p130 = scmp.ne.s32.totalorder %s121, %s122
      %p131 = scmp.eq.s32.totalorder %s32, 0
      %p132 = por %p130, %p131
      %p133 = scmp.ne.s32.totalorder %s121, %s122
      %p134 = scmp.eq.s32.totalorder %s33, 3
      %p135 = por %p133, %p134
      %p137 = scmp.ne.s32.totalorder %s122, %s136
      %p138 = scmp.eq.s32.totalorder %s33, 0
      %p139 = por %p137, %p138
      %s141 = sadd.s32 %s140, 1
      %p144 = scmp.eq.s32.totalorder %s27, 3
      %p145 = scmp.ne.s32.totalorder %s140, %s142
      %p146 = scmp.eq.s32.totalorder %s27, 0
      %p147 = por %p145, %p146
      %p148 = scmp.ne.s32.totalorder %s140, %s142
      %p149 = scmp.eq.s32.totalorder %s32, 3
      %p150 = por %p148, %p149
      %p151 = scmp.ne.s32.totalorder %s142, %s143
      %p152 = scmp.eq.s32.totalorder %s32, 0
      %p153 = por %p151, %p152
      %p154 = scmp.ne.s32.totalorder %s142, %s143
      %p155 = scmp.eq.s32.totalorder %s33, 3
      %p156 = por %p154, %p155
      %p158 = scmp.ne.s32.totalorder %s143, %s157
      %p159 = scmp.eq.s32.totalorder %s33, 0
      %p160 = por %p158, %p159
      %s162 = sadd.s32 %s161, 1
      %p165 = scmp.eq.s32.totalorder %s27, 3
      %p166 = scmp.ne.s32.totalorder %s161, %s163
      %p167 = scmp.eq.s32.totalorder %s27, 0
      %p168 = por %p166, %p167
      %p169 = scmp.ne.s32.totalorder %s161, %s163
      %p170 = scmp.eq.s32.totalorder %s32, 3
      %p171 = por %p169, %p170
      %p172 = scmp.ne.s32.totalorder %s163, %s164
      %p173 = scmp.eq.s32.totalorder %s32, 0
      %p174 = por %p172, %p173
      %p175 = scmp.ne.s32.totalorder %s163, %s164
      %p176 = scmp.eq.s32.totalorder %s33, 3
      %p177 = por %p175, %p176
      %p179 = scmp.ne.s32.totalorder %s164, %s178
      %p180 = scmp.eq.s32.totalorder %s33, 0
      %p181 = por %p179, %p180
      %s182 = smul.u32 %s34, 2
      %s183 = sadd.s32 %s182, %s35
      %s184 = smul.u32 %s46, 2
      %s185 = sadd.s32 %s184, %s42
      %s186 = ssub.s32 %s183, %s185
      %p187 = scmp.eq.s32.totalorder %s186, 0
      %s189 = sadd.s32 %s188, 1
      %s190 = scalar_select %p187, %s188, %s189
      %p193 = pneg %p187
      %p194 = scmp.eq.s32.totalorder %s27, 3
      %p195 = por %p193, %p194
      %p196 = scmp.ne.s32.totalorder %s188, %s191
      %p197 = scmp.eq.s32.totalorder %s27, 0
      %p198 = por %p196, %p197
      %p199 = scmp.ne.s32.totalorder %s188, %s191
      %p200 = scmp.eq.s32.totalorder %s32, 3
      %p201 = por %p199, %p200
      %p202 = scmp.ne.s32.totalorder %s191, %s192
      %p203 = scmp.eq.s32.totalorder %s32, 0
      %p204 = por %p202, %p203
      %p205 = scmp.ne.s32.totalorder %s191, %s192
      %p206 = scmp.eq.s32.totalorder %s33, 3
      %p207 = por %p205, %p206
      %p209 = scmp.ne.s32.totalorder %s192, %s208
      %p210 = scmp.eq.s32.totalorder %s33, 0
      %p211 = por %p209, %p210
      %s212 = ssub.s32 %s34, %s46
      %p213 = scmp.eq.s32.totalorder %s212, 0
      %s215 = sadd.s32 %s214, 1
      %s216 = scalar_select %p213, %s214, %s215
      %p219 = pneg %p213
      %p220 = scmp.eq.s32.totalorder %s27, 3
      %p221 = por %p219, %p220
      %p222 = scmp.ne.s32.totalorder %s214, %s217
      %p223 = scmp.eq.s32.totalorder %s27, 0
      %p224 = por %p222, %p223
      %p225 = scmp.ne.s32.totalorder %s214, %s217
      %p226 = scmp.eq.s32.totalorder %s32, 3
      %p227 = por %p225, %p226
      %p228 = scmp.ne.s32.totalorder %s217, %s218
      %p229 = scmp.eq.s32.totalorder %s32, 0
      %p230 = por %p228, %p229
      %p231 = scmp.ne.s32.totalorder %s217, %s218
      %p232 = scmp.eq.s32.totalorder %s33, 3
      %p233 = por %p231, %p232
      %p235 = scmp.ne.s32.totalorder %s218, %s234
      %p236 = scmp.eq.s32.totalorder %s33, 0
      %p237 = por %p235, %p236
      %s238 = ssub.s32 %s34, %s46
      %p239 = scmp.eq.s32.totalorder %s238, 0
      %s241 = sadd.s32 %s240, 1
      %s242 = scalar_select %p239, %s240, %s241
      %p245 = pneg %p239
      %p246 = scmp.eq.s32.totalorder %s27, 3
      %p247 = por %p245, %p246
      %p248 = scmp.ne.s32.totalorder %s240, %s243
      %p249 = scmp.eq.s32.totalorder %s27, 0
      %p250 = por %p248, %p249
      %p251 = scmp.ne.s32.totalorder %s240, %s243
      %p252 = scmp.eq.s32.totalorder %s32, 3
      %p253 = por %p251, %p252
      %p254 = scmp.ne.s32.totalorder %s243, %s244
      %p255 = scmp.eq.s32.totalorder %s32, 0
      %p256 = por %p254, %p255
      %p257 = scmp.ne.s32.totalorder %s243, %s244
      %p258 = scmp.eq.s32.totalorder %s33, 3
      %p259 = por %p257, %p258
      %p261 = scmp.ne.s32.totalorder %s244, %s260
      %p262 = scmp.eq.s32.totalorder %s33, 0
      %p263 = por %p261, %p262
      %s264 = ssub.s32 %s34, %s46
      %p265 = scmp.eq.s32.totalorder %s264, 0
      %s267 = sadd.s32 %s266, 1
      %s268 = scalar_select %p265, %s266, %s267
      %p271 = pneg %p265
      %p272 = scmp.eq.s32.totalorder %s27, 3
      %p273 = por %p271, %p272
      %p274 = scmp.ne.s32.totalorder %s266, %s269
      %p275 = scmp.eq.s32.totalorder %s27, 0
      %p276 = por %p274, %p275
      %p277 = scmp.ne.s32.totalorder %s266, %s269
      %p278 = scmp.eq.s32.totalorder %s32, 3
      %p279 = por %p277, %p278
      %p280 = scmp.ne.s32.totalorder %s269, %s270
      %p281 = scmp.eq.s32.totalorder %s32, 0
      %p282 = por %p280, %p281
      %p283 = scmp.ne.s32.totalorder %s269, %s270
      %p284 = scmp.eq.s32.totalorder %s33, 3
      %p285 = por %p283, %p284
      %p287 = scmp.ne.s32.totalorder %s270, %s286
      %p288 = scmp.eq.s32.totalorder %s33, 0
      %p289 = por %p287, %p288
      %p290 = scmp.le.s32.totalorder 1, %s27
      %p291 = scmp.lt.s32.totalorder %s27, 5
      %p292 = pnand %p290, %p291
      %p293 = pneg %p292
      // Predicated region
      $region9: #{tpu_custom_call.1} parent=5 // pred_check
        _
      $region10: #{tpu_custom_call.1} parent=5 // pred_check_branch
        %295 = sbr.rel (%p292) target = $region12
      $region11: #{tpu_custom_call.1} parent=5 // pred_region
        %s296 = ssub.s32 %s27, 1
        // Predicated region
        $region13: #{tpu_custom_call.1} parent=11 // pred_check
          %p297 = pneg %p90
        $region14: #{tpu_custom_call.1} parent=11 // pred_check_branch
          %299 = sbr.rel (%p297) target = $region16
        $region15: #{tpu_custom_call.1} parent=11 // pred_region
          %301 = vsyncadd [#allocation7], 0
          %s303 = sshll.u32 %s1, 4
          %s304 = int_to_ptr.hbm [resolvable:$true] %s303
          %s305 = sshll.u32 [#allocation6], 4
          %s306 = int_to_ptr.vmem [resolvable:$true] %s305
          %308 = dma.hbm_to_vmem [thread:$0]  %s304, 64, %s306, [#allocation7]
        $region16: #{tpu_custom_call.1} parent=11 // pred_fallthru
          _
        // Predicated region
        $region17: #{tpu_custom_call.1} parent=11 // pred_check
          %p309 = pneg %p111
        $region18: #{tpu_custom_call.1} parent=11 // pred_check_branch
          %311 = sbr.rel (%p309) target = $region20
        $region19: #{tpu_custom_call.1} parent=11 // pred_region
          %313 = vsyncadd [#allocation7], 0
          %s314 = sshll.u32 %s2, 4
          %s315 = int_to_ptr.hbm [resolvable:$true] %s314
          %s316 = sshll.u32 [#allocation8], 4
          %s317 = int_to_ptr.vmem [resolvable:$true] %s316
          %322 = dma.hbm_to_vmem [thread:$0]  %s315, 1024, %s317, [#allocation7], 64, 64, 4
        $region20: #{tpu_custom_call.1} parent=11 // pred_fallthru
          _
        // Predicated region
        $region21: #{tpu_custom_call.1} parent=11 // pred_check
          %p323 = pneg %p132
        $region22: #{tpu_custom_call.1} parent=11 // pred_check_branch
          %325 = sbr.rel (%p323) target = $region24
        $region23: #{tpu_custom_call.1} parent=11 // pred_region
          _
        $region24: #{tpu_custom_call.1} parent=11 // pred_fallthru
          _
        // Predicated region
        $region25: #{tpu_custom_call.1} parent=11 // pred_check
          %p326 = pneg %p153
        $region26: #{tpu_custom_call.1} parent=11 // pred_check_branch
          %328 = sbr.rel (%p326) target = $region28
        $region27: #{tpu_custom_call.1} parent=11 // pred_region
          %330 = vsyncadd [#allocation10], 0
          %s331 = sshll.u32 %s4, 4
          %s332 = int_to_ptr.hbm [resolvable:$true] %s331
          %s333 = sshll.u32 [#allocation9], 4
          %s334 = int_to_ptr.vmem [resolvable:$true] %s333
          %339 = dma.hbm_to_vmem [thread:$0]  %s332, 2048, %s334, [#allocation10], 128, 128, 8
        $region28: #{tpu_custom_call.1} parent=11 // pred_fallthru
          _
        // Predicated region
        $region29: #{tpu_custom_call.1} parent=11 // pred_check
          %p340 = pneg %p174
        $region30: #{tpu_custom_call.1} parent=11 // pred_check_branch
          %342 = sbr.rel (%p340) target = $region32
        $region31: #{tpu_custom_call.1} parent=11 // pred_region
          _
        $region32: #{tpu_custom_call.1} parent=11 // pred_fallthru
          _
      $region12: #{tpu_custom_call.1} parent=5 // pred_fallthru
        _
      %p343 = scmp.lt.s32.totalorder %s27, 4
      // Predicated region
      $region33: #{tpu_custom_call.1} parent=5 // pred_check
        %p344 = pneg %p343
      $region34: #{tpu_custom_call.1} parent=5 // pred_check_branch
        %346 = sbr.rel (%p344) target = $region36
      $region35: #{tpu_custom_call.1} parent=5 // pred_region
        // Predicated region
        $region37: #{tpu_custom_call.1} parent=35 // pred_check
          %p347 = pneg %p63
        $region38: #{tpu_custom_call.1} parent=35 // pred_check_branch
          %349 = sbr.rel (%p347) target = $region40
        $region39: #{tpu_custom_call.1} parent=35 // pred_region
          %s350 = sand.u32 %s53, 1
          %s351 = scalar_lea.sflag [#allocation4], %s350
          %s352 = sand.u32 %s53, 1
          %s353 = smul.addr %s352, 8
          %s354 = scalar_lea.vmem [#allocation3], %s353
          %s355 = smul.u32 %s34, 2
          %s356 = sadd.s32 %s355, %s35
          %s357 = smul.u32 2, %s356
          %359 = vsyncadd %s351, 0
          %s360 = smul.addr %s357, 4
          %s361 = scalar_lea.hbm %s0, %s360
          %s362 = sshll.u32 %s361, 4
          %s363 = int_to_ptr.hbm [resolvable:$true] %s362
          %s364 = sshll.u32 %s354, 4
          %s365 = int_to_ptr.vmem [resolvable:$true] %s364
          %370 = dma.hbm_to_vmem [thread:$0]  %s363, 128, %s365, %s351, 64, 64, 4
        $region40: #{tpu_custom_call.1} parent=35 // pred_fallthru
          _
      $region36: #{tpu_custom_call.1} parent=5 // pred_fallthru
        _
      %p371 = scmp.le.s32.totalorder 1, %s27
      %p372 = scmp.lt.s32.totalorder %s27, 5
      %p373 = pnand %p371, %p372
      %p374 = pneg %p373
      // Predicated region
      $region41: #{tpu_custom_call.1} parent=5 // pred_check
        _
      $region42: #{tpu_custom_call.1} parent=5 // pred_check_branch
        %376 = sbr.rel (%p373) target = $region44
      $region43: #{tpu_custom_call.1} parent=5 // pred_region
        %s377 = ssub.s32 %s27, 1
        %s378 = sand.u32 %s56, 1
        %s379 = scalar_lea.sflag [#allocation4], %s378
        %s380 = sand.u32 %s56, 1
        %s381 = smul.addr %s380, 8
        %s382 = scalar_lea.vmem [#allocation3], %s381
        // Predicated region
        $region45: #{tpu_custom_call.1} parent=43 // pred_check
          %p383 = pneg %p69
        $region46: #{tpu_custom_call.1} parent=43 // pred_check_branch
          %385 = sbr.rel (%p383) target = $region48
        $region47: #{tpu_custom_call.1} parent=43 // pred_region
          %387 = dma.done %s379, 128
        $region48: #{tpu_custom_call.1} parent=43 // pred_fallthru
          _
        // Predicated region
        $region49: #{tpu_custom_call.1} parent=43 // pred_check
          %p388 = pneg %p90
        $region50: #{tpu_custom_call.1} parent=43 // pred_check_branch
          %390 = sbr.rel (%p388) target = $region52
        $region51: #{tpu_custom_call.1} parent=43 // pred_region
          %392 = dma.done [#allocation7], 64
        $region52: #{tpu_custom_call.1} parent=43 // pred_fallthru
          _
        // Predicated region
        $region53: #{tpu_custom_call.1} parent=43 // pred_check
          %p393 = pneg %p111
        $region54: #{tpu_custom_call.1} parent=43 // pred_check_branch
          %395 = sbr.rel (%p393) target = $region56
        $region55: #{tpu_custom_call.1} parent=43 // pred_region
          %397 = dma.done [#allocation7], 1024
        $region56: #{tpu_custom_call.1} parent=43 // pred_fallthru
          _
        // Predicated region
        $region57: #{tpu_custom_call.1} parent=43 // pred_check
          %p398 = pneg %p153
        $region58: #{tpu_custom_call.1} parent=43 // pred_check_branch
          %400 = sbr.rel (%p398) target = $region60
        $region59: #{tpu_custom_call.1} parent=43 // pred_region
          %402 = dma.done [#allocation10], 2048
        $region60: #{tpu_custom_call.1} parent=43 // pred_fallthru
          _
        %s403 = sand.u32 %s56, 1
        %s404 = scalar_lea.sflag [#allocation4], %s403
        %s405 = sand.u32 %s56, 1
        %s406 = smul.addr %s405, 8
        %s407 = scalar_lea.vmem [#allocation3], %s406
        %p408 = pneg %p69
        %p409 = pneg %p66
        %p410 = pneg %p90
        %p411 = pneg %p87
        %p412 = pneg %p111
        %p413 = pneg %p108
        %p414 = pneg %p132
        %p415 = pneg %p129
        %p416 = pneg %p153
        %p417 = pneg %p150
        %p418 = pneg %p174
        %p419 = pneg %p171
        %p420 = pneg %p204
        %p421 = pneg %p201
        %s422 = smul.u32 %s36, 2
        %s423 = sadd.s32 %s422, %s37
        %s424 = smul.u32 2, %s423
        %p425 = scmp.lt.s32.totalorder %s424, 7
        %s426 = scalar_select %p425, %s424, 7
        %s427 = smul.addr %s426, 8
        %s428 = scalar_lea.vmem %s6, %s427
        %p429 = pneg %p230
        %p430 = pneg %p227
        %s431 = sand.u32 %s217, 1
        %s432 = scalar_lea.sflag [#allocation5], %s431
        %s433 = sand.u32 %s217, 1
        %s434 = scalar_lea.vmem [#allocation11], %s433
        %p435 = pneg %p256
        %p436 = pneg %p253
        %s437 = sand.u32 %s243, 1
        %s438 = scalar_lea.sflag [#allocation13], %s437
        %s439 = sand.u32 %s243, 1
        %s440 = scalar_lea.vmem [#allocation12], %s439
        %p441 = pneg %p282
        %p442 = pneg %p279
        %p443 = scmp.lt.s32.totalorder %s36, 1
        %s444 = scalar_select %p443, %s36, 1
        %s445 = smul.addr %s444, 16
        %s446 = smul.addr %s445, 8
        %s447 = scalar_lea.vmem %s9, %s446
        %s448 = smul.u32 %s36, 2
        %s449 = sadd.s32 %s448, %s37
        %s450 = smul.u32 2, %s449
        %s451 = smul.u32 %s36, 2
        %s452 = sadd.s32 %s451, %s37
        %s453 = smul.u32 2, %s452
        %p454 = scmp.lt.s32.totalorder %s453, 7
        %s455 = scalar_select %p454, %s453, 7
        %s456 = smul.addr %s455, 8
        %s457 = scalar_lea.vmem %s6, %s456
        %s458 = smul.u32 %s36, 2
        %s459 = sadd.s32 %s458, %s37
        %s460 = smul.u32 2, %s459
        %p461 = scmp.lt.s32.totalorder %s36, 1
        %s462 = scalar_select %p461, %s36, 1
        %s463 = smul.addr %s462, 16
        %s464 = smul.addr %s463, 8
        %s465 = scalar_lea.vmem %s9, %s464
        %p467 = scmp.eq.s32.totalorder %s37, 0
        // Predicated region
        $region61: #{tpu_custom_call.1} parent=43 // pred_check
          %p468 = pneg %p467
        $region62: #{tpu_custom_call.1} parent=43 // pred_check_branch
          %470 = sbr.rel (%p468) target = $region64
        $region63: #{tpu_custom_call.1} parent=43 // pred_region
          %v471 = vld [vmem:[#allocation6] sm:$0xf]
          %v472 = vld [vmem:[#allocation9] sm:$0xf]
          %v473 = vld [vmem:[#allocation9 + $0x8] sm:$0xf]
          %v474 = vld [vmem:[#allocation9 + $0x10] sm:$0xf]
          %v475 = vld [vmem:[#allocation9 + $0x18] sm:$0xf]
          %v476 = vld [vmem:[#allocation9 + $0x20] sm:$0xf]
          %v477 = vld [vmem:[#allocation9 + $0x28] sm:$0xf]
          %v478 = vld [vmem:[#allocation9 + $0x30] sm:$0xf]
          %v479 = vld [vmem:[#allocation9 + $0x38] sm:$0xf]
          %v480 = vld [vmem:[#allocation9 + $0x40] sm:$0xf]
          %v481 = vld [vmem:[#allocation9 + $0x48] sm:$0xf]
          %v482 = vld [vmem:[#allocation9 + $0x50] sm:$0xf]
          %v483 = vld [vmem:[#allocation9 + $0x58] sm:$0xf]
          %v484 = vld [vmem:[#allocation9 + $0x60] sm:$0xf]
          %v485 = vld [vmem:[#allocation9 + $0x68] sm:$0xf]
          %v486 = vld [vmem:[#allocation9 + $0x70] sm:$0xf]
          %v487 = vld [vmem:[#allocation9 + $0x78] sm:$0xf]
          %v488 = vld [vmem:[%s5] sm:$0x1]
          %v490 = vperm.slane %v488, 0
          %v508 = vunpack.c.l.b16 %v472
          %v509 = vunpack.c.l.b16 %v473
          %v510 = vunpack.c.l.b16 %v474
          %v511 = vunpack.c.l.b16 %v475
          %v512 = vunpack.c.l.b16 %v476
          %v513 = vunpack.c.l.b16 %v477
          %v514 = vunpack.c.l.b16 %v478
          %v515 = vunpack.c.l.b16 %v479
          %v516 = vunpack.c.l.b16 %v480
          %v517 = vunpack.c.l.b16 %v481
          %v518 = vunpack.c.l.b16 %v482
          %v519 = vunpack.c.l.b16 %v483
          %v520 = vunpack.c.l.b16 %v484
          %v521 = vunpack.c.l.b16 %v485
          %v522 = vunpack.c.l.b16 %v486
          %v523 = vunpack.c.l.b16 %v487
          %v524 = vpack.c.b16 %v509, %v508
          %v525 = vpack.c.b16 %v511, %v510
          %v526 = vpack.c.b16 %v513, %v512
          %v527 = vpack.c.b16 %v515, %v514
          %v528 = vpack.c.b16 %v517, %v516
          %v529 = vpack.c.b16 %v519, %v518
          %v530 = vpack.c.b16 %v521, %v520
          %v531 = vpack.c.b16 %v523, %v522
          %540 = vmatpush.bf16.msra.mxu0 %v531
          %541 = vmatpush.bf16.msra.mxu0 %v530
          %542 = vmatpush.bf16.msra.mxu0 %v529
          %543 = vmatpush.bf16.msra.mxu0 %v528
          %544 = vmatpush.bf16.msra.mxu0 %v527
          %545 = vmatpush.bf16.msra.mxu0 %v526
          %546 = vmatpush.bf16.msra.mxu0 %v525
          %547 = vmatpush.bf16.msra.mxu0 %v524
          %548 = vmatmul.bf16.gmra.mxu0 %v471
          %v549 = vpop.f32.mrf.mxu0
          %v550 = vadd.f32 %v490, %v549
          %v551 = vpop.f32.mrf.mxu0
          %552 = vdwg.mxu0
          %v553 = vtanh.pop %v550
          %v554 = vpack.c.bf16 %v553, %v553
          %555 = vst [vmem:[#allocation2] sm:$0xf] %v554
          %vm556 = vcmask 57344
          %557 = vst.msk [vmem:[%s434] sm:$0x1] %vm556, -1e+30
          %558 = vst.msk [vmem:[%s440] sm:$0x1] %vm556, 0.0
          %vm559 = vcmask 64512
          %560 = vst.msk [vmem:[%s465] sm:$0xff] %vm559, 0.0
          %561 = vst.msk [vmem:[%s465 + $0x8] sm:$0xff] %vm559, 0.0
          %562 = vst.msk [vmem:[%s465 + $0x10] sm:$0xff] %vm559, 0.0
          %563 = vst.msk [vmem:[%s465 + $0x18] sm:$0xff] %vm559, 0.0
          %564 = vst.msk [vmem:[%s465 + $0x20] sm:$0xff] %vm559, 0.0
          %565 = vst.msk [vmem:[%s465 + $0x28] sm:$0xff] %vm559, 0.0
          %566 = vst.msk [vmem:[%s465 + $0x30] sm:$0xff] %vm559, 0.0
          %567 = vst.msk [vmem:[%s465 + $0x38] sm:$0xff] %vm559, 0.0
          %568 = vst.msk [vmem:[%s465 + $0x40] sm:$0xff] %vm559, 0.0
          %569 = vst.msk [vmem:[%s465 + $0x48] sm:$0xff] %vm559, 0.0
          %570 = vst.msk [vmem:[%s465 + $0x50] sm:$0xff] %vm559, 0.0
          %571 = vst.msk [vmem:[%s465 + $0x58] sm:$0xff] %vm559, 0.0
          %572 = vst.msk [vmem:[%s465 + $0x60] sm:$0xff] %vm559, 0.0
          %573 = vst.msk [vmem:[%s465 + $0x68] sm:$0xff] %vm559, 0.0
          %574 = vst.msk [vmem:[%s465 + $0x70] sm:$0xff] %vm559, 0.0
          %575 = vst.msk [vmem:[%s465 + $0x78] sm:$0xff] %vm559, 0.0
        $region64: #{tpu_custom_call.1} parent=43 // pred_fallthru
          _
        %v576 = vld [vmem:[%s382] sm:$0xf]
        %v577 = vld [vmem:[%s382 + $0x4] sm:$0xf]
        %v578 = vld [vmem:[#allocation8] sm:$0xf]
        %v579 = vld [vmem:[#allocation8 + $0x4] sm:$0xf]
        %v580 = vld [vmem:[#allocation8 + $0x8] sm:$0xf]
        %v581 = vld [vmem:[#allocation8 + $0xc] sm:$0xf]
        %v582 = vld [vmem:[#allocation8 + $0x10] sm:$0xf]
        %v583 = vld [vmem:[#allocation8 + $0x14] sm:$0xf]
        %v584 = vld [vmem:[#allocation8 + $0x18] sm:$0xf]
        %v585 = vld [vmem:[#allocation8 + $0x1c] sm:$0xf]
        %v586 = vld [vmem:[#allocation8 + $0x20] sm:$0xf]
        %v587 = vld [vmem:[#allocation8 + $0x24] sm:$0xf]
        %v588 = vld [vmem:[#allocation8 + $0x28] sm:$0xf]
        %v589 = vld [vmem:[#allocation8 + $0x2c] sm:$0xf]
        %v590 = vld [vmem:[#allocation8 + $0x30] sm:$0xf]
        %v591 = vld [vmem:[#allocation8 + $0x34] sm:$0xf]
        %v592 = vld [vmem:[#allocation8 + $0x38] sm:$0xf]
        %v593 = vld [vmem:[#allocation8 + $0x3c] sm:$0xf]
        %v594 = vld [vmem:[%s3] sm:$0x1]
        %v596 = vperm.slane %v594, 0
        %v600 = vunpack.c.l.b16 %v576
        %v601 = vunpack.c.l.b16 %v577
        %v602 = vpack.c.b16 %v601, %v600
        %v620 = vunpack.c.l.b16 %v578
        %v621 = vunpack.c.l.b16 %v579
        %v622 = vunpack.c.l.b16 %v580
        %v623 = vunpack.c.l.b16 %v581
        %v624 = vunpack.c.l.b16 %v582
        %v625 = vunpack.c.l.b16 %v583
        %v626 = vunpack.c.l.b16 %v584
        %v627 = vunpack.c.l.b16 %v585
        %v628 = vunpack.c.l.b16 %v586
        %v629 = vunpack.c.l.b16 %v587
        %v630 = vunpack.c.l.b16 %v588
        %v631 = vunpack.c.l.b16 %v589
        %v632 = vunpack.c.l.b16 %v590
        %v633 = vunpack.c.l.b16 %v591
        %v634 = vunpack.c.l.b16 %v592
        %v635 = vunpack.c.l.b16 %v593
        %v636 = vpack.c.b16 %v621, %v620
        %v637 = vpack.c.b16 %v623, %v622
        %v638 = vpack.c.b16 %v625, %v624
        %v639 = vpack.c.b16 %v627, %v626
        %v640 = vpack.c.b16 %v629, %v628
        %v641 = vpack.c.b16 %v631, %v630
        %v642 = vpack.c.b16 %v633, %v632
        %v643 = vpack.c.b16 %v635, %v634
        %652 = vmatpush.bf16.msra.mxu0 %v643
        %653 = vmatpush.bf16.msra.mxu0 %v642
        %654 = vmatpush.bf16.msra.mxu0 %v641
        %655 = vmatpush.bf16.msra.mxu0 %v640
        %656 = vmatpush.bf16.msra.mxu0 %v639
        %657 = vmatpush.bf16.msra.mxu0 %v638
        %658 = vmatpush.bf16.msra.mxu0 %v637
        %659 = vmatpush.bf16.msra.mxu0 %v636
        %660 = vmatmul.bf16.gmra.mxu0 %v602
        %v661 = vpop.f32.mrf.mxu0
        %v662 = vadd.f32 %v596, %v661
        %v663 = vpop.f32.mrf.mxu0
        %v664 = vadd.f32 %v596, %v663
        %665 = vdwg.mxu0
        %v666 = vmax.f32 %v662, 0.0
        %v667 = vmax.f32 %v664, 0.0
        %v668 = vpack.c.bf16 %v667, %v666
        %v669 = vld [vmem:[#allocation9] sm:$0xff]
        %v670 = vld [vmem:[#allocation9 + $0x8] sm:$0xff]
        %v671 = vld [vmem:[#allocation9 + $0x10] sm:$0xff]
        %v672 = vld [vmem:[#allocation9 + $0x18] sm:$0xff]
        %v673 = vld [vmem:[#allocation9 + $0x20] sm:$0xff]
        %v674 = vld [vmem:[#allocation9 + $0x28] sm:$0xff]
        %v675 = vld [vmem:[#allocation9 + $0x30] sm:$0xff]
        %v676 = vld [vmem:[#allocation9 + $0x38] sm:$0xff]
        %v677 = vld [vmem:[#allocation9 + $0x40] sm:$0xff]
        %v678 = vld [vmem:[#allocation9 + $0x48] sm:$0xff]
        %v679 = vld [vmem:[#allocation9 + $0x50] sm:$0xff]
        %v680 = vld [vmem:[#allocation9 + $0x58] sm:$0xff]
        %v681 = vld [vmem:[#allocation9 + $0x60] sm:$0xff]
        %v682 = vld [vmem:[#allocation9 + $0x68] sm:$0xff]
        %v683 = vld [vmem:[#allocation9 + $0x70] sm:$0xff]
        %v684 = vld [vmem:[#allocation9 + $0x78] sm:$0xff]
        %v701 = vunpack.c.l.b16 %v669
        %v702 = vunpack.c.h.b16 %v669
        %v703 = vunpack.c.l.b16 %v670
        %v704 = vunpack.c.h.b16 %v670
        %v705 = vunpack.c.l.b16 %v671
        %v706 = vunpack.c.h.b16 %v671
        %v707 = vunpack.c.l.b16 %v672
        %v708 = vunpack.c.h.b16 %v672
        %v709 = vunpack.c.l.b16 %v673
        %v710 = vunpack.c.h.b16 %v673
        %v711 = vunpack.c.l.b16 %v674
        %v712 = vunpack.c.h.b16 %v674
        %v713 = vunpack.c.l.b16 %v675
        %v714 = vunpack.c.h.b16 %v675
        %v715 = vunpack.c.l.b16 %v676
        %v716 = vunpack.c.h.b16 %v676
        %v717 = vunpack.c.l.b16 %v677
        %v718 = vunpack.c.h.b16 %v677
        %v719 = vunpack.c.l.b16 %v678
        %v720 = vunpack.c.h.b16 %v678
        %v721 = vunpack.c.l.b16 %v679
        %v722 = vunpack.c.h.b16 %v679
        %v723 = vunpack.c.l.b16 %v680
        %v724 = vunpack.c.h.b16 %v680
        %v725 = vunpack.c.l.b16 %v681
        %v726 = vunpack.c.h.b16 %v681
        %v727 = vunpack.c.l.b16 %v682
        %v728 = vunpack.c.h.b16 %v682
        %v729 = vunpack.c.l.b16 %v683
        %v730 = vunpack.c.h.b16 %v683
        %v731 = vunpack.c.l.b16 %v684
        %v732 = vunpack.c.h.b16 %v684
        %v733 = vpack.c.b16 %v703, %v701
        %v734 = vpack.c.b16 %v704, %v702
        %v735 = vpack.c.b16 %v707, %v705
        %v736 = vpack.c.b16 %v708, %v706
        %v737 = vpack.c.b16 %v711, %v709
        %v738 = vpack.c.b16 %v712, %v710
        %v739 = vpack.c.b16 %v715, %v713
        %v740 = vpack.c.b16 %v716, %v714
        %v741 = vpack.c.b16 %v719, %v717
        %v742 = vpack.c.b16 %v720, %v718
        %v743 = vpack.c.b16 %v723, %v721
        %v744 = vpack.c.b16 %v724, %v722
        %v745 = vpack.c.b16 %v727, %v725
        %v746 = vpack.c.b16 %v728, %v726
        %v747 = vpack.c.b16 %v731, %v729
        %v748 = vpack.c.b16 %v732, %v730
        %765 = vmatpush.bf16.msra.mxu0 %v747
        %766 = vmatpush.bf16.msra.mxu0 %v745
        %767 = vmatpush.bf16.msra.mxu0 %v743
        %768 = vmatpush.bf16.msra.mxu0 %v741
        %769 = vmatpush.bf16.msra.mxu0 %v739
        %770 = vmatpush.bf16.msra.mxu0 %v737
        %771 = vmatpush.bf16.msra.mxu0 %v735
        %772 = vmatpush.bf16.msra.mxu0 %v733
        %773 = vmatmul.bf16.gmra.mxu0 %v668
        %v774 = vpop.f32.mrf.mxu0
        %v775 = vadd.f32 0.0, %v774
        %v776 = vpop.f32.mrf.mxu0
        %v777 = vadd.f32 0.0, %v776
        %778 = vdwg.mxu0
        %779 = vmatpush.bf16.msra.mxu0 %v748
        %780 = vmatpush.bf16.msra.mxu0 %v746
        %781 = vmatpush.bf16.msra.mxu0 %v744
        %782 = vmatpush.bf16.msra.mxu0 %v742
        %783 = vmatpush.bf16.msra.mxu0 %v740
        %784 = vmatpush.bf16.msra.mxu0 %v738
        %785 = vmatpush.bf16.msra.mxu0 %v736
        %786 = vmatpush.bf16.msra.mxu0 %v734
        %787 = vmatmul.bf16.gmra.mxu0 %v668
        %v788 = vpop.f32.mrf.mxu0
        %v789 = vadd.f32 0.0, %v788
        %v790 = vpop.f32.mrf.mxu0
        %v791 = vadd.f32 0.0, %v790
        %792 = vdwg.mxu0
        %v793 = vld [vmem:[%s5] sm:$0x1]
        %v795 = vperm.slane %v793, 0
        %v797 = vadd.f32 %v775, %v795
        %v798 = vadd.f32 %v777, %v795
        %v799 = vpack.c.bf16 %v798, %v797
        %v800 = vunpack.c.l.bf16 %v799
        %v801 = vunpack.c.h.bf16 %v799
        %v802 = vtanh.pop %v800
        %v803 = vtanh.pop %v801
        %v804 = vpack.c.bf16 %v803, %v802
        %v805 = vld [vmem:[#allocation2] sm:$0xf]
        %806 = vmatpush.bf16.xpose.msra.mxu0 0
        %807 = vmatpush.bf16.xpose.msra.mxu0 0
        %808 = vmatpush.bf16.xpose.msra.mxu0 0
        %809 = vmatpush.bf16.xpose.msra.mxu0 0
        %810 = vmatpush.bf16.xpose.msra.mxu0 0
        %811 = vmatpush.bf16.xpose.msra.mxu0 0
        %812 = vmatpush.bf16.xpose.msra.mxu0 0
        %813 = vmatpush.bf16.xpose.msra.mxu0 %v805
        %814 = vmatmul.bf16.gmra.mxu0 %v804
        %v815 = vpop.f32.mrf.mxu0
        %v816 = vadd.f32 0.0, %v815
        %v817 = vpop.f32.mrf.mxu0
        %v818 = vadd.f32 0.0, %v817
        %819 = vdwg.mxu0
        %v820 = vmul.f32 %v816, 0.088388346
        %v821 = vmul.f32 %v818, 0.088388346
        %s822 = smul.u32 %s36, 2
        %s823 = sadd.s32 %s822, %s37
        %s824 = smul.u32 %s823, 16
        %v825 = vlaneseq
        %v826 = vshrl.u32 %v825, 7
        %v827 = vadd.s32 %v826, 8
        %v828 = vstv %s824
        %v829 = vadd.s32 %v828, %v826
        %v830 = vadd.s32 %v828, %v827
        %vm831 = vcmp.lt.s32.totalorder %v829, 60
        %vm832 = vcmp.lt.s32.totalorder %v830, 60
        %v833 = vsel %vm831, 1, 0
        %v834 = vsel %vm832, 1, 0
        %vm835 = vcmp.eq.s32.totalorder %v833, 1
        %vm836 = vcmp.eq.s32.totalorder %v834, 1
        %v837 = vsel %vm835, %v820, -1e+30
        %v838 = vsel %vm836, %v821, -1e+30
        %vm839 = vcmask 64512
        %840 = vst.msk [vmem:[%s457] sm:$0xff] %vm839, %v837
        %841 = vst.msk [vmem:[%s457 + $0x8] sm:$0xff] %vm839, %v838
        %v842 = vld [vmem:[%s434] sm:$0x1]
        %v843 = vsel %vm839, %v837, -inf
        %v844 = vsel %vm839, %v838, -inf
        %v845 = vmax.f32 %v843, %v844
        %v846 = vrot.slane %v845, 4
        %v847 = vmax.f32 %v845, %v846
        %v848 = vrot.slane %v847, 2
        %v849 = vmax.f32 %v847, %v848
        %v850 = vrot.slane %v849, 1
        %v851 = vmax.f32 %v849, %v850
        %v852 = vmax.f32 %v842, %v851
        %v853 = vsub.f32 %v842, %v852
        %v854 = vmul.f32 %v853, 1.442695
        %v855 = vpow.pop %v854
        %v857 = vperm.slane %v852, 0
        %v859 = vsub.f32 %v837, %v857
        %v860 = vsub.f32 %v838, %v857
        %v861 = vmul.f32 %v859, 1.442695
        %v862 = vpow.pop %v861
        %v863 = vmul.f32 %v860, 1.442695
        %v864 = vpow.pop %v863
        %v865 = vsel %vm835, %v862, 0.0
        %v866 = vsel %vm836, %v864, 0.0
        %v867 = vld [vmem:[%s440] sm:$0x1]
        %v868 = vmul.f32 %v867, %v855
        %v869 = vsel %vm839, %v865, 0.0
        %v870 = vsel %vm839, %v866, 0.0
        %v871 = vadd.f32 %v869, %v870
        %v872 = vrot.slane %v871, 4
        %v873 = vadd.f32 %v871, %v872
        %v874 = vrot.slane %v873, 2
        %v875 = vadd.f32 %v873, %v874
        %v876 = vrot.slane %v875, 1
        %v877 = vadd.f32 %v875, %v876
        %v878 = vadd.f32 %v868, %v877
        %vm879 = vcmask 57344
        %880 = vst.msk [vmem:[%s440] sm:$0x1] %vm879, %v878
        %881 = vst.msk [vmem:[%s434] sm:$0x1] %vm879, %v852
        %v882 = vld [vmem:[%s465] sm:$0xff]
        %v883 = vld [vmem:[%s465 + $0x8] sm:$0xff]
        %v884 = vld [vmem:[%s465 + $0x10] sm:$0xff]
        %v885 = vld [vmem:[%s465 + $0x18] sm:$0xff]
        %v886 = vld [vmem:[%s465 + $0x20] sm:$0xff]
        %v887 = vld [vmem:[%s465 + $0x28] sm:$0xff]
        %v888 = vld [vmem:[%s465 + $0x30] sm:$0xff]
        %v889 = vld [vmem:[%s465 + $0x38] sm:$0xff]
        %v890 = vld [vmem:[%s465 + $0x40] sm:$0xff]
        %v891 = vld [vmem:[%s465 + $0x48] sm:$0xff]
        %v892 = vld [vmem:[%s465 + $0x50] sm:$0xff]
        %v893 = vld [vmem:[%s465 + $0x58] sm:$0xff]
        %v894 = vld [vmem:[%s465 + $0x60] sm:$0xff]
        %v895 = vld [vmem:[%s465 + $0x68] sm:$0xff]
        %v896 = vld [vmem:[%s465 + $0x70] sm:$0xff]
        %v897 = vld [vmem:[%s465 + $0x78] sm:$0xff]
        %v899 = vperm.slane %v855, 0
        %v901 = vmul.f32 %v882, %v899
        %v902 = vmul.f32 %v883, %v899
        %v903 = vmul.f32 %v884, %v899
        %v904 = vmul.f32 %v885, %v899
        %v905 = vmul.f32 %v886, %v899
        %v906 = vmul.f32 %v887, %v899
        %v907 = vmul.f32 %v888, %v899
        %v908 = vmul.f32 %v889, %v899
        %v909 = vmul.f32 %v890, %v899
        %v910 = vmul.f32 %v891, %v899
        %v911 = vmul.f32 %v892, %v899
        %v912 = vmul.f32 %v893, %v899
        %v913 = vmul.f32 %v894, %v899
        %v914 = vmul.f32 %v895, %v899
        %v915 = vmul.f32 %v896, %v899
        %v916 = vmul.f32 %v897, %v899
        %v917 = vpack.c.bf16 %v791, %v789
        %v918 = vpack.c.bf16 %v866, %v865
        %919 = vxpose.xlu0.c.b16.start [1/8] %v917, 128
        %920 = vxpose.xlu0.c.b16.cont [2/8] 0, 128
        %921 = vxpose.xlu0.c.b16.cont [3/8] 0, 128
        %922 = vxpose.xlu0.c.b16.cont [4/8] 0, 128
        %923 = vxpose.xlu0.c.b16.cont [5/8] 0, 128
        %924 = vxpose.xlu0.c.b16.cont [6/8] 0, 128
        %925 = vxpose.xlu0.c.b16.cont [7/8] 0, 128
        %926 = vxpose.xlu0.c.b16.end [8/8] 0, 128
        %v927 = vpop.trf.xlu0
        %v928 = vpop.trf.xlu0
        %v929 = vpop.trf.xlu0
        %v930 = vpop.trf.xlu0
        %v931 = vpop.trf.xlu0
        %v932 = vpop.trf.xlu0
        %v933 = vpop.trf.xlu0
        %v934 = vpop.trf.xlu0
        %vm935 = vcmask 130048
        %v937 = vsel %vm935, %v927, 0
        %v940 = vsel %vm935, %v928, 0
        %v943 = vsel %vm935, %v929, 0
        %v946 = vsel %vm935, %v930, 0
        %v949 = vsel %vm935, %v931, 0
        %v952 = vsel %vm935, %v932, 0
        %v955 = vsel %vm935, %v933, 0
        %v958 = vsel %vm935, %v934, 0
        %960 = vmatpush.bf16.msra.mxu0 0
        %961 = vmatpush.bf16.msra.mxu0 0
        %962 = vmatpush.bf16.msra.mxu0 0
        %963 = vmatpush.bf16.msra.mxu0 0
        %964 = vmatpush.bf16.msra.mxu0 0
        %965 = vmatpush.bf16.msra.mxu0 0
        %966 = vmatpush.bf16.msra.mxu0 0
        %967 = vmatpush.bf16.msra.mxu0 %v918
        %968 = vmatmul.bf16.gmra.mxu0 %v937
        %v969 = vpop.f32.mrf.mxu0
        %v970 = vadd.f32 0.0, %v969
        %v971 = vpop.f32.mrf.mxu0
        %v972 = vadd.f32 0.0, %v971
        %973 = vmatmul.bf16.gmra.mxu0 %v940
        %v974 = vpop.f32.mrf.mxu0
        %v975 = vadd.f32 0.0, %v974
        %v976 = vpop.f32.mrf.mxu0
        %v977 = vadd.f32 0.0, %v976
        %978 = vmatmul.bf16.gmra.mxu0 %v943
        %v979 = vpop.f32.mrf.mxu0
        %v980 = vadd.f32 0.0, %v979
        %v981 = vpop.f32.mrf.mxu0
        %v982 = vadd.f32 0.0, %v981
        %983 = vmatmul.bf16.gmra.mxu0 %v946
        %v984 = vpop.f32.mrf.mxu0
        %v985 = vadd.f32 0.0, %v984
        %v986 = vpop.f32.mrf.mxu0
        %v987 = vadd.f32 0.0, %v986
        %988 = vmatmul.bf16.gmra.mxu0 %v949
        %v989 = vpop.f32.mrf.mxu0
        %v990 = vadd.f32 0.0, %v989
        %v991 = vpop.f32.mrf.mxu0
        %v992 = vadd.f32 0.0, %v991
        %993 = vmatmul.bf16.gmra.mxu0 %v952
        %v994 = vpop.f32.mrf.mxu0
        %v995 = vadd.f32 0.0, %v994
        %v996 = vpop.f32.mrf.mxu0
        %v997 = vadd.f32 0.0, %v996
        %998 = vmatmul.bf16.gmra.mxu0 %v955
        %v999 = vpop.f32.mrf.mxu0
        %v1000 = vadd.f32 0.0, %v999
        %v1001 = vpop.f32.mrf.mxu0
        %v1002 = vadd.f32 0.0, %v1001
        %1003 = vmatmul.bf16.gmra.mxu0 %v958
        %v1004 = vpop.f32.mrf.mxu0
        %v1005 = vadd.f32 0.0, %v1004
        %v1006 = vpop.f32.mrf.mxu0
        %v1007 = vadd.f32 0.0, %v1006
        %1008 = vdwg.mxu0
        %v1009 = vadd.f32 %v901, %v970
        %v1010 = vadd.f32 %v902, %v972
        %v1011 = vadd.f32 %v903, %v975
        %v1012 = vadd.f32 %v904, %v977
        %v1013 = vadd.f32 %v905, %v980
        %v1014 = vadd.f32 %v906, %v982
        %v1015 = vadd.f32 %v907, %v985
        %v1016 = vadd.f32 %v908, %v987
        %v1017 = vadd.f32 %v909, %v990
        %v1018 = vadd.f32 %v910, %v992
        %v1019 = vadd.f32 %v911, %v995
        %v1020 = vadd.f32 %v912, %v997
        %v1021 = vadd.f32 %v913, %v1000
        %v1022 = vadd.f32 %v914, %v1002
        %v1023 = vadd.f32 %v915, %v1005
        %v1024 = vadd.f32 %v916, %v1007
        %1025 = vst.msk [vmem:[%s465] sm:$0xff] %vm839, %v1009
        %1026 = vst.msk [vmem:[%s465 + $0x8] sm:$0xff] %vm839, %v1010
        %1027 = vst.msk [vmem:[%s465 + $0x10] sm:$0xff] %vm839, %v1011
        %1028 = vst.msk [vmem:[%s465 + $0x18] sm:$0xff] %vm839, %v1012
        %1029 = vst.msk [vmem:[%s465 + $0x20] sm:$0xff] %vm839, %v1013
        %1030 = vst.msk [vmem:[%s465 + $0x28] sm:$0xff] %vm839, %v1014
        %1031 = vst.msk [vmem:[%s465 + $0x30] sm:$0xff] %vm839, %v1015
        %1032 = vst.msk [vmem:[%s465 + $0x38] sm:$0xff] %vm839, %v1016
        %1033 = vst.msk [vmem:[%s465 + $0x40] sm:$0xff] %vm839, %v1017
        %1034 = vst.msk [vmem:[%s465 + $0x48] sm:$0xff] %vm839, %v1018
        %1035 = vst.msk [vmem:[%s465 + $0x50] sm:$0xff] %vm839, %v1019
        %1036 = vst.msk [vmem:[%s465 + $0x58] sm:$0xff] %vm839, %v1020
        %1037 = vst.msk [vmem:[%s465 + $0x60] sm:$0xff] %vm839, %v1021
        %1038 = vst.msk [vmem:[%s465 + $0x68] sm:$0xff] %vm839, %v1022
        %1039 = vst.msk [vmem:[%s465 + $0x70] sm:$0xff] %vm839, %v1023
        %1040 = vst.msk [vmem:[%s465 + $0x78] sm:$0xff] %vm839, %v1024
        %s1041 = smul.u32 %s36, 2
        %s1042 = sadd.s32 %s1041, %s37
        %s1043 = smul.u32 2, %s1042
        %p1044 = scmp.lt.s32.totalorder %s1043, 7
        %s1045 = scalar_select %p1044, %s1043, 7
        %s1046 = smul.addr %s1045, 8
        %s1047 = scalar_lea.vmem %s6, %s1046
        %s1048 = sand.u32 %s217, 1
        %s1049 = scalar_lea.sflag [#allocation5], %s1048
        %s1050 = sand.u32 %s217, 1
        %s1051 = scalar_lea.vmem [#allocation11], %s1050
        %s1052 = sand.u32 %s243, 1
        %s1053 = scalar_lea.sflag [#allocation13], %s1052
        %s1054 = sand.u32 %s243, 1
        %s1055 = scalar_lea.vmem [#allocation12], %s1054
        %p1056 = scmp.lt.s32.totalorder %s36, 1
        %s1057 = scalar_select %p1056, %s36, 1
        %s1058 = smul.addr %s1057, 16
        %s1059 = smul.addr %s1058, 8
        %s1060 = scalar_lea.vmem %s9, %s1059
        // Predicated region
        $region65: #{tpu_custom_call.1} parent=43 // pred_check
          %p1061 = pneg %p201
        $region66: #{tpu_custom_call.1} parent=43 // pred_check_branch
          %1063 = sbr.rel (%p1061) target = $region68
        $region67: #{tpu_custom_call.1} parent=43 // pred_region
          %s1064 = smul.u32 %s36, 2
          %s1065 = sadd.s32 %s1064, %s37
          %s1066 = smul.u32 2, %s1065
        $region68: #{tpu_custom_call.1} parent=43 // pred_fallthru
          _
        // Predicated region
        $region69: #{tpu_custom_call.1} parent=43 // pred_check
          %p1067 = pneg %p227
        $region70: #{tpu_custom_call.1} parent=43 // pred_check_branch
          %1069 = sbr.rel (%p1067) target = $region72
        $region71: #{tpu_custom_call.1} parent=43 // pred_region
          %1071 = vsyncadd %s1049, 0
          %s1072 = scalar_lea.hbm %s7, %s36
          %s1074 = sshll.u32 %s1051, 4
          %s1075 = int_to_ptr.vmem [resolvable:$true] %s1074
          %s1076 = sshll.u32 %s1072, 4
          %s1077 = int_to_ptr.hbm [resolvable:$true] %s1076
          %1079 = dma.vmem_to_hbm [thread:$0]  %s1075, 16, %s1077, %s1049
        $region72: #{tpu_custom_call.1} parent=43 // pred_fallthru
          _
        // Predicated region
        $region73: #{tpu_custom_call.1} parent=43 // pred_check
          %p1080 = pneg %p253
        $region74: #{tpu_custom_call.1} parent=43 // pred_check_branch
          %1082 = sbr.rel (%p1080) target = $region76
        $region75: #{tpu_custom_call.1} parent=43 // pred_region
          %1084 = vsyncadd %s1053, 0
          %s1085 = scalar_lea.hbm %s8, %s36
          %s1087 = sshll.u32 %s1055, 4
          %s1088 = int_to_ptr.vmem [resolvable:$true] %s1087
          %s1089 = sshll.u32 %s1085, 4
          %s1090 = int_to_ptr.hbm [resolvable:$true] %s1089
          %1092 = dma.vmem_to_hbm [thread:$0]  %s1088, 16, %s1090, %s1053
        $region76: #{tpu_custom_call.1} parent=43 // pred_fallthru
          _
        // Predicated region
        $region77: #{tpu_custom_call.1} parent=43 // pred_check
          %p1093 = pneg %p279
        $region78: #{tpu_custom_call.1} parent=43 // pred_check_branch
          %1095 = sbr.rel (%p1093) target = $region80
        $region79: #{tpu_custom_call.1} parent=43 // pred_region
          _
        $region80: #{tpu_custom_call.1} parent=43 // pred_fallthru
          _
      $region44: #{tpu_custom_call.1} parent=5 // pred_fallthru
        _
      %p1096 = scmp.le.s32.totalorder 2, %s27
      // Predicated region
      $region81: #{tpu_custom_call.1} parent=5 // pred_check
        %p1097 = pneg %p1096
      $region82: #{tpu_custom_call.1} parent=5 // pred_check_branch
        %1099 = sbr.rel (%p1097) target = $region84
      $region83: #{tpu_custom_call.1} parent=5 // pred_region
        %s1100 = ssub.s32 %s27, 2
        // Predicated region
        $region85: #{tpu_custom_call.1} parent=83 // pred_check
          %p1101 = pneg %p207
        $region86: #{tpu_custom_call.1} parent=83 // pred_check_branch
          %1103 = sbr.rel (%p1101) target = $region88
        $region87: #{tpu_custom_call.1} parent=83 // pred_region
          %s1104 = smul.u32 %s38, 2
          %s1105 = sadd.s32 %s1104, %s39
          %s1106 = smul.u32 2, %s1105
          %p1107 = scmp.lt.s32.totalorder %s1106, 7
          %s1108 = scalar_select %p1107, %s1106, 7
          %s1109 = smul.addr %s1108, 8
          %s1110 = scalar_lea.vmem %s6, %s1109
        $region88: #{tpu_custom_call.1} parent=83 // pred_fallthru
          _
        // Predicated region
        $region89: #{tpu_custom_call.1} parent=83 // pred_check
          %p1111 = pneg %p233
        $region90: #{tpu_custom_call.1} parent=83 // pred_check_branch
          %1113 = sbr.rel (%p1111) target = $region92
        $region91: #{tpu_custom_call.1} parent=83 // pred_region
          %s1114 = sand.u32 %s218, 1
          %s1115 = scalar_lea.sflag [#allocation5], %s1114
          %s1116 = sand.u32 %s218, 1
          %s1117 = scalar_lea.vmem [#allocation11], %s1116
          %1119 = dma.done %s1115, 16
        $region92: #{tpu_custom_call.1} parent=83 // pred_fallthru
          _
        // Predicated region
        $region93: #{tpu_custom_call.1} parent=83 // pred_check
          %p1120 = pneg %p259
        $region94: #{tpu_custom_call.1} parent=83 // pred_check_branch
          %1122 = sbr.rel (%p1120) target = $region96
        $region95: #{tpu_custom_call.1} parent=83 // pred_region
          %s1123 = sand.u32 %s244, 1
          %s1124 = scalar_lea.sflag [#allocation13], %s1123
          %s1125 = sand.u32 %s244, 1
          %s1126 = scalar_lea.vmem [#allocation12], %s1125
          %1128 = dma.done %s1124, 16
        $region96: #{tpu_custom_call.1} parent=83 // pred_fallthru
          _
        // Predicated region
        $region97: #{tpu_custom_call.1} parent=83 // pred_check
          %p1129 = pneg %p285
        $region98: #{tpu_custom_call.1} parent=83 // pred_check_branch
          %1131 = sbr.rel (%p1129) target = $region100
        $region99: #{tpu_custom_call.1} parent=83 // pred_region
          %p1132 = scmp.lt.s32.totalorder %s38, 1
          %s1133 = scalar_select %p1132, %s38, 1
          %s1134 = smul.addr %s1133, 16
          %s1135 = smul.addr %s1134, 8
          %s1136 = scalar_lea.vmem %s9, %s1135
        $region100: #{tpu_custom_call.1} parent=83 // pred_fallthru
          _
      $region84: #{tpu_custom_call.1} parent=5 // pred_fallthru
        _
    $region6: #{tpu_custom_call.1} parent=1 // loop_footer
      %s31 = sadd.s32 1, %s27
    $region7: #{tpu_custom_call.1} parent=1 // loop_footer_branch
      %26 = sbr.rel target = $region3
    $region8: #{tpu_custom_call.1} parent=1 // loop_exit
      _
    %1137 = vsyncpa [#allocation4], 1
    %s1138 = scalar_lea.sflag [#allocation4], 1
    %1139 = vsyncpa %s1138, 1
    %1140 = vsyncpa [#allocation7], 1
    %1141 = vsyncpa [#allocation10], 1
    %1142 = vsyncpa [#allocation5], 1
    %s1143 = scalar_lea.sflag [#allocation5], 1
    %1144 = vsyncpa %s1143, 1
    %1145 = vsyncpa [#allocation13], 1
    %s1146 = scalar_lea.sflag [#allocation13], 1
    %1147 = vsyncpa %s1146, 1

</llo_original>
